<compile_context>
chip_gen: v7x
topology: tpu7x:2x2x1
jax: 0.10.0
libtpu: 0.0.40
codegen_flags: <defaults>
</compile_context>

<pallas_src>
import math
from functools import partial

import jax
import jax.numpy as jnp
from jax.experimental import pallas as pl
from jax.experimental.pallas import tpu as pltpu

LN_EPS = 1e-12


# ---------------------------------------------------------------------------
# Helpers
# ---------------------------------------------------------------------------
def _vmem_limit_bytes(nbytes_needed):
    """Request enough VMEM for the working set but never the whole physical
    VMEM (64 MiB/TC on v7x, 128 MiB on v5e/v6e); leave headroom for the
    compiler's internal scratch."""
    try:
        cap = int(pltpu.get_tpu_info().vmem_capacity_bytes)
    except Exception:
        cap = 64 * 1024 * 1024
    cap = (cap // 8) * 7
    lo = 32 * 1024 * 1024
    return int(min(max(int(nbytes_needed * 1.5), lo), max(cap, lo)))


def _const_spec(block_shape, index_map):
    """BlockSpec for blocks whose index never changes: a single VMEM buffer
    (default double-buffering would hold two pointless copies of the weight)."""
    try:
        return pl.BlockSpec(block_shape, index_map,
                            pipeline_mode=pl.Buffered(buffer_count=1))
    except (AttributeError, TypeError):
        return pl.BlockSpec(block_shape, index_map)


def _pick_head_group(num_heads, head_dim):
    """Smallest head group whose combined width is a multiple of 128 lanes so
    Q/K/V column slices and the context store stay lane-dense; falls back to
    all heads (group width == hidden size) for small models."""
    for hg in range(1, num_heads + 1):
        if num_heads % hg == 0 and (hg * head_dim) % 128 == 0:
            return hg
    return num_heads


def _pick_q_tile(seq_len, target):
    """Largest divisor of S that is <= target and MXU friendly (multiple of 8)."""
    for t in range(min(target, seq_len), 0, -1):
        if seq_len % t == 0 and (t % 8 == 0 or t == seq_len):
            return t
    return seq_len


# ---------------------------------------------------------------------------
# SelfAttention kernel
# ---------------------------------------------------------------------------
def _self_attention_kernel(h_ref, mask_ref, w_ref, b_ref, ctx_ref, probs_ref,
                           q_scr, k_scr, v_scr,
                           *, heads_per_group, head_dim, q_tile):
    g_dim = heads_per_group * head_dim
    seq_len = h_ref.shape[1]
    qi = pl.program_id(2)

    # Fused QKV projection for this (batch, head group): one (S,H)@(H,3*g_dim)
    # MXU matmul in the native dtype with f32 accumulation, run once per head
    # group (first query tile) and kept resident in VMEM scratch.
    @pl.when(qi == 0)
    def _():
        h = h_ref[0]                                             # (S, H)
        qkv = jnp.dot(h, w_ref[0], preferred_element_type=jnp.float32)
        qkv = (qkv + b_ref[0].astype(jnp.float32)).astype(q_scr.dtype)
        q = qkv[:, 0 * g_dim:1 * g_dim].reshape(seq_len, heads_per_group, head_dim)
        k = qkv[:, 1 * g_dim:2 * g_dim].reshape(seq_len, heads_per_group, head_dim)
        v = qkv[:, 2 * g_dim:3 * g_dim].reshape(seq_len, heads_per_group, head_dim)
        q_scr[...] = jnp.transpose(q, (1, 0, 2))                 # (hg, S, dh)
        k_scr[...] = jnp.transpose(k, (1, 0, 2))
        v_scr[...] = jnp.transpose(v, (1, 0, 2))

    mask = mask_ref[...].astype(jnp.float32)                     # (1, 1, S) additive
    scale = 1.0 / math.sqrt(head_dim)

    start = pl.multiple_of(qi * q_tile, q_tile)
    q = q_scr[:, pl.ds(start, q_tile), :]                        # (hg, tq, dh)
    k = k_scr[...]                                               # (hg, S, dh)
    v = v_scr[...]

    # Scores in the operands' native dtype (bf16 MXU fast path), f32 accumulate.
    s = jnp.einsum("hqd,hkd->hqk", q, k,
                   preferred_element_type=jnp.float32) * scale + mask

    m = jnp.max(s, axis=-1, keepdims=True)
    e = jnp.exp(s - m)
    denom = jnp.sum(e, axis=-1, keepdims=True)
    inv = pl.reciprocal(denom, approx=True)                      # EUP slot
    inv = inv * (2.0 - denom * inv)                              # one NR step -> ~f32 exact
    p = e * inv                                                  # (hg, tq, S) f32

    # TODO(synk): attention-probs dropout is identity (eval mode); training
    # dropout would use pltpu.prng_seed / pltpu.prng_random_bits here.
    probs_ref[0] = p.astype(probs_ref.dtype)

    ctx = jnp.einsum("hqk,hkd->qhd", p.astype(v.dtype), v,
                     preferred_element_type=jnp.float32)         # (tq, hg, dh)
    ctx_ref[0] = ctx.reshape(q_tile, g_dim).astype(ctx_ref.dtype)


def self_attention(hidden_states, attention_mask, wq, bq, wk, bk, wv, bv,
                   *, num_heads, q_tile_target=256, probs_dtype=jnp.float32):
    """hidden_states: [B, S, H]; attention_mask: head-independent additive mask
    broadcastable to [B, 1, 1, S] (standard BERT key-padding mask). Weights are
    in torch nn.Linear layout (out, in)."""
    B, S, H = hidden_states.shape
    dh = H // num_heads
    dtype = hidden_states.dtype
    itemsize = jnp.dtype(dtype).itemsize

    hg = _pick_head_group(num_heads, dh)      # heads per group (128-lane wide)
    ng = num_heads // hg
    g_dim = hg * dh
    tq = _pick_q_tile(S, q_tile_target)       # query tile (256 on v6e/v7x sizes)
    nq = S // tq

    # Head-independent additive mask; broadcast across queries inside the kernel
    # instead of materializing a (B, S, S) f32 array in HBM.
    mask3 = jnp.broadcast_to(attention_mask.astype(jnp.float32),
                             (B, 1, 1, S)).reshape(B, 1, S)

    # Pre-pack per-head-group fused QKV weights, (ng, H, 3*g_dim), in the input
    # dtype (bf16 MXU fast path for bf16 models). In a real model this packing
    # would be done once at weight-load time.
    def _cols(w):   # torch (out, in) -> per-group column blocks of w.T
        return jnp.asarray(w).astype(dtype).T.reshape(H, ng, g_dim).transpose(1, 0, 2)

    w_qkv = jnp.concatenate([_cols(wq), _cols(wk), _cols(wv)], axis=-1)

    def _bias(b):
        return jnp.asarray(b).astype(jnp.float32).reshape(ng, 1, g_dim)

    b_qkv = jnp.concatenate([_bias(bq), _bias(bk), _bias(bv)], axis=-1)

    p_item = jnp.dtype(probs_dtype).itemsize
    flops = int(B * (6 * S * H * H + 4 * num_heads * S * S * dh))
    bytes_accessed = int(B * S * H * itemsize + B * S * 4
                         + B * (3 * H * H * itemsize + 3 * H * 4)
                         + B * S * H * itemsize
                         + B * num_heads * S * S * p_item)
    vmem_need = (2 * S * H * itemsize                    # hidden (double-buffered)
                 + 2 * S * 4                             # mask
                 + 2 * (H * 3 * g_dim * itemsize + 3 * g_dim * 4)
                 + 2 * tq * g_dim * itemsize             # ctx tile
                 + 2 * hg * tq * S * p_item              # probs tile
                 + 3 * hg * S * dh * itemsize            # Q/K/V scratch
                 + 6 * hg * tq * S * 4)                  # softmax temporaries

    kernel = partial(_self_attention_kernel,
                     heads_per_group=hg, head_dim=dh, q_tile=tq)

    # b and head-group axes are megacore-parallel; the query-tile axis is
    # "arbitrary" because the K/V/Q scratch computed at qi==0 is reused by
    # subsequent query tiles of the same (batch, head group).
    ctx, probs = pl.pallas_call(
        kernel,
        out_shape=(jax.ShapeDtypeStruct((B, S, H), dtype),
                   jax.ShapeDtypeStruct((B, num_heads, S, S), probs_dtype)),
        grid_spec=pltpu.PrefetchScalarGridSpec(
            num_scalar_prefetch=0,
            grid=(B, ng, nq),
            in_specs=[
                pl.BlockSpec((1, S, H), lambda b, g, q: (b, 0, 0)),          # hidden
                pl.BlockSpec((1, 1, S), lambda b, g, q: (b, 0, 0)),          # mask
                pl.BlockSpec((1, H, 3 * g_dim), lambda b, g, q: (g, 0, 0)),  # fused W
                pl.BlockSpec((1, 1, 3 * g_dim), lambda b, g, q: (g, 0, 0)),  # fused b
            ],
            out_specs=(
                pl.BlockSpec((1, tq, g_dim), lambda b, g, q: (b, q, g)),     # context
                pl.BlockSpec((1, hg, tq, S), lambda b, g, q: (b, g, q, 0)),  # probs
            ),
            scratch_shapes=[
                pltpu.VMEM((hg, S, dh), dtype),   # Q (all rows, current group)
                pltpu.VMEM((hg, S, dh), dtype),   # K
                pltpu.VMEM((hg, S, dh), dtype),   # V
            ],
        ),
        compiler_params=pltpu.CompilerParams(
            dimension_semantics=("parallel", "parallel", "arbitrary"),
            vmem_limit_bytes=_vmem_limit_bytes(vmem_need)),
        cost_estimate=pl.CostEstimate(
            flops=flops,
            transcendentals=int(B * num_heads * S * S),
            bytes_accessed=bytes_accessed),
    )(hidden_states, mask3, w_qkv, b_qkv)
    return ctx, probs


# ---------------------------------------------------------------------------
# SelfOutput kernel (dense -> dropout(identity) -> residual -> LayerNorm)
# ---------------------------------------------------------------------------
def _self_output_kernel(h_ref, x_ref, w_ref, b_ref, g_ref, beta_ref, o_ref):
    # Matmul in the operands' native dtype (bf16 MXU fast path), f32 accumulate.
    y = jnp.dot(h_ref[...], w_ref[...], preferred_element_type=jnp.float32)
    # TODO(synk): hidden-states dropout is identity (eval/inference mode).
    y = y + b_ref[...].astype(jnp.float32) + x_ref[...].astype(jnp.float32)

    # LayerNorm epilogue (two-pass mean / centered variance: matches torch).
    mean = jnp.mean(y, axis=-1, keepdims=True)
    c = y - mean
    var = jnp.mean(c * c, axis=-1, keepdims=True)
    normed = c * jax.lax.rsqrt(var + LN_EPS)
    o_ref[...] = (g_ref[...].astype(jnp.float32) * normed
                  + beta_ref[...].astype(jnp.float32)).astype(o_ref.dtype)


def self_output(hidden_states, input_tensor, weight, bias, gamma, beta, *, tm=None):
    """hidden_states, input_tensor: [B, S, H]; weight: [H, H] torch (out, in)."""
    B, S, H = hidden_states.shape
    M = B * S
    dtype = hidden_states.dtype
    itemsize = jnp.dtype(dtype).itemsize

    if tm is None:
        # Memory-bound epilogue: bigger row tiles get closer to HBM roofline.
        # 1024 on 128 MiB-VMEM parts (v5e/v6e), 512 on v7x (64 MiB/TC).
        try:
            big = int(pltpu.get_tpu_info().vmem_capacity_bytes) >= 100 * 1024 * 1024
        except Exception:
            big = False
        tm = 1024 if big else 512

    tm = min(tm, M)
    Mp = -(-M // tm) * tm

    h2 = hidden_states.reshape(M, H)
    x2 = input_tensor.reshape(M, H)
    if Mp != M:
        h2 = jnp.pad(h2, ((0, Mp - M), (0, 0)))
        x2 = jnp.pad(x2, ((0, Mp - M), (0, 0)))

    w_t = jnp.asarray(weight).astype(dtype).T            # (in, out)
    b2 = jnp.asarray(bias).reshape(1, H)
    g2 = jnp.asarray(gamma).reshape(1, H)
    be2 = jnp.asarray(beta).reshape(1, H)

    flops = int(2 * Mp * H * H + 10 * Mp * H)
    bytes_accessed = int(3 * Mp * H * itemsize + H * H * itemsize + 3 * H * 4)
    vmem_need = (2 * 2 * tm * H * itemsize               # h, x double-buffered
                 + 2 * tm * H * itemsize                 # out tile
                 + H * H * itemsize                      # single-buffered weight
                 + 3 * tm * H * 4                        # f32 temporaries
                 + 8 * H * 4)
    # NOTE: if H grows so large that the single-buffered (H, H) weight cannot
    # stay resident (esp. v7x 64 MiB/TC), add a K grid axis marked "arbitrary"
    # with a (tm, H) f32 scratch accumulator (pl.when init/finalize).

    out = pl.pallas_call(
        _self_output_kernel,
        out_shape=jax.ShapeDtypeStruct((Mp, H), dtype),
        grid_spec=pltpu.PrefetchScalarGridSpec(
            num_scalar_prefetch=0,
            grid=(Mp // tm,),
            in_specs=[
                pl.BlockSpec((tm, H), lambda i: (i, 0)),      # hidden rows
                pl.BlockSpec((tm, H), lambda i: (i, 0)),      # residual rows
                _const_spec((H, H), lambda i: (0, 0)),        # weight (single buffer)
                _const_spec((1, H), lambda i: (0, 0)),        # bias
                _const_spec((1, H), lambda i: (0, 0)),        # gamma
                _const_spec((1, H), lambda i: (0, 0)),        # beta
            ],
            out_specs=pl.BlockSpec((tm, H), lambda i: (i, 0)),
        ),
        compiler_params=pltpu.CompilerParams(
            dimension_semantics=("parallel",),
            vmem_limit_bytes=_vmem_limit_bytes(vmem_need)),
        cost_estimate=pl.CostEstimate(
            flops=flops, transcendentals=Mp, bytes_accessed=bytes_accessed),
    )(h2, x2, w_t, b2, g2, be2)

    return out[:M].reshape(B, S, H)


# ---------------------------------------------------------------------------
# Full Attention forward (matches torch Attention.forward, eval mode)
# ---------------------------------------------------------------------------
def attention_forward(input_tensor, attention_mask, params, *, num_heads,
                      q_tile_target=256):
    ctx, probs = self_attention(
        input_tensor, attention_mask,
        params["wq"], params["bq"],
        params["wk"], params["bk"],
        params["wv"], params["bv"],
        num_heads=num_heads, q_tile_target=q_tile_target)
    out = self_output(ctx, input_tensor,
                      params["wo"], params["bo"],
                      params["gamma"], params["beta"])
    return out, probs


# ---------------------------------------------------------------------------
# Pure-JAX reference
# ---------------------------------------------------------------------------
def _reference_attention(x, attention_mask, params, *, num_heads):
    B, S, H = x.shape
    d = H // num_heads
    hp = jax.lax.Precision.HIGHEST

    def lin(t, w, b):
        return jnp.einsum("bsh,oh->bso", t, w, precision=hp) + b

    q = lin(x, params["wq"], params["bq"]).reshape(B, S, num_heads, d).transpose(0, 2, 1, 3)
    k = lin(x, params["wk"], params["bk"]).reshape(B, S, num_heads, d).transpose(0, 2, 1, 3)
    v = lin(x, params["wv"], params["bv"]).reshape(B, S, num_heads, d).transpose(0, 2, 1, 3)
    scores = jnp.einsum("bhqd,bhkd->bhqk", q, k, precision=hp) / math.sqrt(d) + attention_mask
    probs = jax.nn.softmax(scores, axis=-1)
    ctx = jnp.einsum("bhqk,bhkd->bhqd", probs, v,
                     precision=hp).transpose(0, 2, 1, 3).reshape(B, S, H)
    y = jnp.einsum("bsh,oh->bso", ctx, params["wo"], precision=hp) + params["bo"] + x
    u = y.mean(-1, keepdims=True)
    s = ((y - u) ** 2).mean(-1, keepdims=True)
    y = (y - u) / jnp.sqrt(s + LN_EPS)
    return params["gamma"] * y + params["beta"], probs


# ---------------------------------------------------------------------------
# Demo / self-test
# ---------------------------------------------------------------------------
def _make_params(key, H):
    bound = 1.0 / math.sqrt(H)
    keys = jax.random.split(key, 8)

    def lin(k1, k2):
        w = jax.random.uniform(k1, (H, H), minval=-bound, maxval=bound,
                               dtype=jnp.float32)
        b = jax.random.uniform(k2, (H,), minval=-bound, maxval=bound,
                               dtype=jnp.float32)
        return w, b

    wq, bq = lin(keys[0], keys[1])
    wk, bk = lin(keys[2], keys[3])
    wv, bv = lin(keys[4], keys[5])
    wo, bo = lin(keys[6], keys[7])
    return dict(wq=wq, bq=bq, wk=wk, bk=bk, wv=wv, bv=bv, wo=wo, bo=bo,
                gamma=jnp.ones((H,), jnp.float32),
                beta=jnp.zeros((H,), jnp.float32))


def _run_case(key, B, S, H, NH, q_tile_target):
    kx, kp, km = jax.random.split(key, 3)
    x = jax.random.normal(kx, (B, S, H), dtype=jnp.float32)
    params = _make_params(kp, H)

    # BERT-style additive mask: 0 for valid keys, -10000 for padded keys.
    lengths = jax.random.randint(km, (B,), S // 2, S + 1)
    key_valid = (jnp.arange(S)[None, :] < lengths[:, None]).astype(jnp.float32)
    attention_mask = (1.0 - key_valid)[:, None, None, :] * -10000.0   # (B,1,1,S)

    out, probs = attention_forward(x, attention_mask, params, num_heads=NH,
                                   q_tile_target=q_tile_target)
    out = jax.block_until_ready(out)
    probs = jax.block_until_ready(probs)

    ref_out, ref_probs = _reference_attention(x, attention_mask, params,
                                              num_heads=NH)

    assert out.shape == (B, S, H) and probs.shape == (B, NH, S, S)
    assert jnp.allclose(probs, ref_probs, atol=2e-5, rtol=2e-5), \
        f"probs mismatch: max abs diff {jnp.max(jnp.abs(probs - ref_probs))}"
    assert jnp.allclose(out, ref_out, atol=2e-4, rtol=2e-4), \
        f"output mismatch: max abs diff {jnp.max(jnp.abs(out - ref_out))}"


if __name__ == "__main__":
    root = jax.random.PRNGKey(0)
    k1, k2 = jax.random.split(root)

    # Small shapes implied by the module: batch=2, seq=8, hidden=32, heads=4.
    _run_case(k1, B=2, S=8, H=32, NH=4, q_tile_target=256)

    # Slightly larger case exercising the head-group (128-lane) and query-tile
    # grid axes plus the K/V scratch reuse across query tiles.
    _run_case(k2, B=2, S=256, H=256, NH=4, q_tile_target=128)

    print("KERNEL_OK")
</pallas_src>

<mosaic_0001>
module attributes {stable_mosaic.version = 11 : i64} {
  func.func @_self_attention_kernel(%arg0: i32, %arg1: i32, %arg2: i32, %arg3: memref<1x8x32xf32, #tpu.memory_space<vmem>>, %arg4: memref<1x1x8xf32, #tpu.memory_space<vmem>>, %arg5: memref<1x32x96xf32, #tpu.memory_space<vmem>>, %arg6: memref<1x1x96xf32, #tpu.memory_space<vmem>>, %arg7: memref<1x8x32xf32, #tpu.memory_space<vmem>>, %arg8: memref<1x4x8x8xf32, #tpu.memory_space<vmem>>, %arg9: memref<4x8x8xf32, #tpu.memory_space<vmem>>, %arg10: memref<4x8x8xf32, #tpu.memory_space<vmem>>, %arg11: memref<4x8x8xf32, #tpu.memory_space<vmem>>) attributes {dimension_semantics = [#tpu.dimension_semantics<parallel>, #tpu.dimension_semantics<parallel>, #tpu.dimension_semantics<arbitrary>], iteration_bounds = array<i64: 2, 1, 1>, scalar_prefetch = 0 : i64, scratch_operands = 3 : i64, tpu.core_type = #tpu.core_type<tc>, window_params = [{transform_indices = @transform_0, window_bounds = array<i64: 1, 8, 32>}, {transform_indices = @transform_1, window_bounds = array<i64: 1, 1, 8>}, {transform_indices = @transform_2, window_bounds = array<i64: 1, 32, 96>}, {transform_indices = @transform_3, window_bounds = array<i64: 1, 1, 96>}, {transform_indices = @transform_4, window_bounds = array<i64: 1, 8, 32>}, {transform_indices = @transform_5, window_bounds = array<i64: 1, 4, 8, 8>}]} {
    %c0_i32 = arith.constant 0 : i32
    %0 = arith.cmpi eq, %arg2, %c0_i32 : i32
    %1 = arith.extui %0 : i1 to i32
    %c0_i32_0 = arith.constant 0 : i32
    %2 = arith.cmpi ne, %1, %c0_i32_0 : i32
    scf.if %2 {
      %c0_23 = arith.constant 0 : index
      %c0_24 = arith.constant 0 : index
      %c0_25 = arith.constant 0 : index
      %38 = vector.load %arg3[%c0_23, %c0_24, %c0_25] : memref<1x8x32xf32, #tpu.memory_space<vmem>>, vector<1x8x32xf32>
      %39 = vector.shape_cast %38 : vector<1x8x32xf32> to vector<8x32xf32>
      %c0_26 = arith.constant 0 : index
      %c0_27 = arith.constant 0 : index
      %c0_28 = arith.constant 0 : index
      %40 = vector.load %arg5[%c0_26, %c0_27, %c0_28] : memref<1x32x96xf32, #tpu.memory_space<vmem>>, vector<1x32x96xf32>
      %41 = vector.shape_cast %40 : vector<1x32x96xf32> to vector<32x96xf32>
      %cst_29 = arith.constant dense<0.000000e+00> : vector<8x96xf32>
      %42 = tpu.matmul %39, %41, %cst_29 {dimension_numbers = #tpu.dot_dimension_numbers<[1], [0], [0], [1], [0, 0, 1, 1], [], []>} : vector<8x32xf32>, vector<32x96xf32>, vector<8x96xf32> -> vector<8x96xf32>
      %c0_30 = arith.constant 0 : index
      %c0_31 = arith.constant 0 : index
      %c0_32 = arith.constant 0 : index
      %43 = vector.load %arg6[%c0_30, %c0_31, %c0_32] : memref<1x1x96xf32, #tpu.memory_space<vmem>>, vector<1x1x96xf32>
      %44 = vector.shape_cast %43 : vector<1x1x96xf32> to vector<1x96xf32>
      %45 = vector.broadcast %44 : vector<1x96xf32> to vector<8x96xf32>
      %46 = arith.addf %42, %45 : vector<8x96xf32>
      %47 = vector.extract_strided_slice %46 {offsets = [0, 0], sizes = [8, 32], strides = [1, 1]} : vector<8x96xf32> to vector<8x32xf32>
      %48 = vector.shape_cast %47 : vector<8x32xf32> to vector<8x4x8xf32>
      %49 = vector.extract_strided_slice %46 {offsets = [0, 32], sizes = [8, 32], strides = [1, 1]} : vector<8x96xf32> to vector<8x32xf32>
      %50 = vector.shape_cast %49 : vector<8x32xf32> to vector<8x4x8xf32>
      %51 = vector.extract_strided_slice %46 {offsets = [0, 64], sizes = [8, 32], strides = [1, 1]} : vector<8x96xf32> to vector<8x32xf32>
      %52 = vector.shape_cast %51 : vector<8x32xf32> to vector<8x4x8xf32>
      %53 = tpu.transpose %48, [1, 0, 2] : vector<8x4x8xf32> -> vector<4x8x8xf32>
      %c0_33 = arith.constant 0 : index
      %c0_34 = arith.constant 0 : index
      %c0_35 = arith.constant 0 : index
      %54 = vector.load %arg9[%c0_33, %c0_34, %c0_35] : memref<4x8x8xf32, #tpu.memory_space<vmem>>, vector<4x8x8xf32>
      tpu.vector_store %arg9[%c0_33, %c0_34, %c0_35], %53 {strides = array<i32>} : memref<4x8x8xf32, #tpu.memory_space<vmem>>, vector<4x8x8xf32>,
      %55 = tpu.transpose %50, [1, 0, 2] : vector<8x4x8xf32> -> vector<4x8x8xf32>
      %c0_36 = arith.constant 0 : index
      %c0_37 = arith.constant 0 : index
      %c0_38 = arith.constant 0 : index
      %56 = vector.load %arg10[%c0_36, %c0_37, %c0_38] : memref<4x8x8xf32, #tpu.memory_space<vmem>>, vector<4x8x8xf32>
      tpu.vector_store %arg10[%c0_36, %c0_37, %c0_38], %55 {strides = array<i32>} : memref<4x8x8xf32, #tpu.memory_space<vmem>>, vector<4x8x8xf32>,
      %57 = tpu.transpose %52, [1, 0, 2] : vector<8x4x8xf32> -> vector<4x8x8xf32>
      %c0_39 = arith.constant 0 : index
      %c0_40 = arith.constant 0 : index
      %c0_41 = arith.constant 0 : index
      %58 = vector.load %arg11[%c0_39, %c0_40, %c0_41] : memref<4x8x8xf32, #tpu.memory_space<vmem>>, vector<4x8x8xf32>
      tpu.vector_store %arg11[%c0_39, %c0_40, %c0_41], %57 {strides = array<i32>} : memref<4x8x8xf32, #tpu.memory_space<vmem>>, vector<4x8x8xf32>,
    } else {
    }
    %c0 = arith.constant 0 : index
    %c0_1 = arith.constant 0 : index
    %c0_2 = arith.constant 0 : index
    %3 = vector.load %arg4[%c0, %c0_1, %c0_2] : memref<1x1x8xf32, #tpu.memory_space<vmem>>, vector<1x1x8xf32>
    %c8_i32 = arith.constant 8 : i32
    %4 = arith.muli %arg2, %c8_i32 : i32
    %5 = tpu.assume_multiple %4, 8 : i32
    %c0_3 = arith.constant 0 : index
    %6 = arith.index_cast %5 : i32 to index
    %c0_4 = arith.constant 0 : index
    %7 = vector.load %arg9[%c0_3, %6, %c0_4] : memref<4x8x8xf32, #tpu.memory_space<vmem>>, vector<4x8x8xf32>
    %c0_5 = arith.constant 0 : index
    %c0_6 = arith.constant 0 : index
    %c0_7 = arith.constant 0 : index
    %8 = vector.load %arg10[%c0_5, %c0_6, %c0_7] : memref<4x8x8xf32, #tpu.memory_space<vmem>>, vector<4x8x8xf32>
    %c0_8 = arith.constant 0 : index
    %c0_9 = arith.constant 0 : index
    %c0_10 = arith.constant 0 : index
    %9 = vector.load %arg11[%c0_8, %c0_9, %c0_10] : memref<4x8x8xf32, #tpu.memory_space<vmem>>, vector<4x8x8xf32>
    "tpu.trace_start"() <{level = 10 : i32, message = "hqd,hkd->hqk"}> : () -> ()
    %cst = arith.constant dense<0.000000e+00> : vector<4x8x8xf32>
    %10 = tpu.matmul %7, %8, %cst {dimension_numbers = #tpu.dot_dimension_numbers<[2], [2], [1], [1], [0, 0, 0, 1, 1, 1], [0], [0]>} : vector<4x8x8xf32>, vector<4x8x8xf32>, vector<4x8x8xf32> -> vector<4x8x8xf32>
    "tpu.trace_stop"() : () -> ()
    %cst_11 = arith.constant 0.353553385 : f32
    %11 = vector.broadcast %cst_11 : f32 to vector<4x8x8xf32>
    %12 = arith.mulf %10, %11 : vector<4x8x8xf32>
    %13 = vector.broadcast %3 : vector<1x1x8xf32> to vector<4x8x8xf32>
    %14 = arith.addf %12, %13 : vector<4x8x8xf32>
    %cst_12 = arith.constant dense<0xFF800000> : vector<4x8xf32>
    %15 = vector.multi_reduction <maximumf>, %14, %cst_12 [2] : vector<4x8x8xf32> to vector<4x8xf32>
    %16 = vector.shape_cast %15 : vector<4x8xf32> to vector<4x8x1xf32>
    %17 = vector.broadcast %16 : vector<4x8x1xf32> to vector<4x8x8xf32>
    %18 = arith.subf %14, %17 : vector<4x8x8xf32>
    %19 = math.exp %18 : vector<4x8x8xf32>
    %cst_13 = arith.constant dense<0.000000e+00> : vector<4x8xf32>
    %20 = vector.multi_reduction <add>, %19, %cst_13 [2] : vector<4x8x8xf32> to vector<4x8xf32>
    %21 = vector.shape_cast %20 : vector<4x8xf32> to vector<4x8x1xf32>
    %22 = tpu.reciprocal %21 {approx = true} : vector<4x8x1xf32> -> vector<4x8x1xf32>
    %23 = arith.mulf %21, %22 : vector<4x8x1xf32>
    %cst_14 = arith.constant 2.000000e+00 : f32
    %24 = vector.broadcast %cst_14 : f32 to vector<4x8x1xf32>
    %25 = arith.subf %24, %23 : vector<4x8x1xf32>
    %26 = arith.mulf %22, %25 : vector<4x8x1xf32>
    %27 = vector.broadcast %26 : vector<4x8x1xf32> to vector<4x8x8xf32>
    %28 = arith.mulf %19, %27 : vector<4x8x8xf32>
    %c0_15 = arith.constant 0 : index
    %c0_16 = arith.constant 0 : index
    %c0_17 = arith.constant 0 : index
    %c0_18 = arith.constant 0 : index
    %29 = vector.load %arg8[%c0_15, %c0_16, %c0_17, %c0_18] : memref<1x4x8x8xf32, #tpu.memory_space<vmem>>, vector<1x4x8x8xf32>
    %30 = vector.shape_cast %29 : vector<1x4x8x8xf32> to vector<4x8x8xf32>
    %31 = vector.shape_cast %28 : vector<4x8x8xf32> to vector<1x4x8x8xf32>
    tpu.vector_store %arg8[%c0_15, %c0_16, %c0_17, %c0_18], %31 {strides = array<i32>} : memref<1x4x8x8xf32, #tpu.memory_space<vmem>>, vector<1x4x8x8xf32>,
    "tpu.trace_start"() <{level = 10 : i32, message = "hqk,hkd->qhd"}> : () -> ()
    %cst_19 = arith.constant dense<0.000000e+00> : vector<4x8x8xf32>
    %32 = tpu.matmul %9, %28, %cst_19 {dimension_numbers = #tpu.dot_dimension_numbers<[1], [2], [2], [1], [0, 0, 0, 2, 1, 1], [0], [0]>} : vector<4x8x8xf32>, vector<4x8x8xf32>, vector<4x8x8xf32> -> vector<4x8x8xf32>
    %33 = tpu.transpose %32, [2, 0, 1] : vector<4x8x8xf32> -> vector<8x4x8xf32>
    "tpu.trace_stop"() : () -> ()
    %34 = vector.shape_cast %33 : vector<8x4x8xf32> to vector<8x32xf32>
    %c0_20 = arith.constant 0 : index
    %c0_21 = arith.constant 0 : index
    %c0_22 = arith.constant 0 : index
    %35 = vector.load %arg7[%c0_20, %c0_21, %c0_22] : memref<1x8x32xf32, #tpu.memory_space<vmem>>, vector<1x8x32xf32>
    %36 = vector.shape_cast %35 : vector<1x8x32xf32> to vector<8x32xf32>
    %37 = vector.shape_cast %34 : vector<8x32xf32> to vector<1x8x32xf32>
    tpu.vector_store %arg7[%c0_20, %c0_21, %c0_22], %37 {strides = array<i32>} : memref<1x8x32xf32, #tpu.memory_space<vmem>>, vector<1x8x32xf32>,
    return
  }
  func.func @transform_0(%arg0: i32, %arg1: i32, %arg2: i32) -> (i32, i32, i32) {
    %c0_i32 = arith.constant 0 : i32
    %c0_i32_0 = arith.constant 0 : i32
    %c0_i32_1 = arith.constant 0 : i32
    return %arg0, %c0_i32, %c0_i32_0 : i32, i32, i32
  }
  func.func @transform_1(%arg0: i32, %arg1: i32, %arg2: i32) -> (i32, i32, i32) {
    %c0_i32 = arith.constant 0 : i32
    %c0_i32_0 = arith.constant 0 : i32
    %c0_i32_1 = arith.constant 0 : i32
    return %arg0, %c0_i32, %c0_i32_0 : i32, i32, i32
  }
  func.func @transform_2(%arg0: i32, %arg1: i32, %arg2: i32) -> (i32, i32, i32) {
    %c0_i32 = arith.constant 0 : i32
    %c0_i32_0 = arith.constant 0 : i32
    %c0_i32_1 = arith.constant 0 : i32
    return %arg1, %c0_i32, %c0_i32_0 : i32, i32, i32
  }
  func.func @transform_3(%arg0: i32, %arg1: i32, %arg2: i32) -> (i32, i32, i32) {
    %c0_i32 = arith.constant 0 : i32
    %c0_i32_0 = arith.constant 0 : i32
    %c0_i32_1 = arith.constant 0 : i32
    return %arg1, %c0_i32, %c0_i32_0 : i32, i32, i32
  }
  func.func @transform_4(%arg0: i32, %arg1: i32, %arg2: i32) -> (i32, i32, i32) {
    %c0_i32 = arith.constant 0 : i32
    return %arg0, %arg2, %arg1 : i32, i32, i32
  }
  func.func @transform_5(%arg0: i32, %arg1: i32, %arg2: i32) -> (i32, i32, i32, i32) {
    %c0_i32 = arith.constant 0 : i32
    %c0_i32_0 = arith.constant 0 : i32
    return %arg0, %arg1, %arg2, %c0_i32 : i32, i32, i32, i32
  }
}

</mosaic_0001>

<llo_original>
// kernel: tpu_custom_call.1
$region0: #{tpu_custom_call.1}
  #allocation0 [shape = 'u32[]', space=smem, size = 0x4, offset = 0x4, fixed_abs, tag = 'smem constant byte address 0x4 - core index']
  #allocation1 [shape = 'u32[144,128]{1,0:T(1,128)}', space=vmem, size = 0x12000, scoped, tag = 'internal scratch']
  #allocation2 [shape = 'f32[4,8,8]{2,1,0:T(8,128)}', space=vmem, size = 0x4000, scoped, tag = 'scratch operand']
  #allocation3 [shape = 'f32[4,8,8]{2,1,0:T(8,128)}', space=vmem, size = 0x4000, scoped, tag = 'scratch operand']
  #allocation4 [shape = 'f32[4,8,8]{2,1,0:T(8,128)}', space=vmem, size = 0x4000, scoped, tag = 'scratch operand']
  %s0 = inlined_call_operand.hbm [shape: f32[2,8,32], index: 0, kind: input, shape index: {}]
  %s1 = inlined_call_operand.vmem [shape: f32[2,1,8], index: 1, kind: input, shape index: {}]
  %s2 = inlined_call_operand.hbm [shape: f32[1,32,96], index: 2, kind: input, shape index: {}]
  %s3 = inlined_call_operand.vmem [shape: f32[1,1,96], index: 3, kind: input, shape index: {}]
  %s4 = inlined_call_operand.hbm [shape: f32[2,8,32], index: 4, kind: output, shape index: {0}]
  %s5 = inlined_call_operand.hbm [shape: f32[2,4,8,8], index: 5, kind: output, shape index: {1}]
  %6 = xla_tuple %s4, %s5
  %s7 = sld [smem:[#allocation0]]
  $region69: #{tpu_custom_call.1} parent=0
    _
  %s9 = ssub.s32 1, %s7
  %s10 = scalar_select 0, %s9, %s7
  $region1: #{tpu_custom_call.1} parent=0
    #allocation5 [shape = 'u8[8192]{0}', space=vmem, size = 0x2000, scoped, tag = 'input window, operand 0']
    #allocation6 [shape = 's32[2]{0}', space=sflag, size = 0x8, scoped, tag = 'scoped memory for tpu_custom_call.1']
    #allocation7 [shape = 's32[2]{0}', space=sflag, size = 0x8, scoped, tag = 'scoped memory for tpu_custom_call.1']
    #allocation8 [shape = 'u8[16384]{0}', space=vmem, size = 0x4000, scoped, tag = 'input window, operand 2, single buffered']
    #allocation9 [shape = 's32[1]{0}', space=sflag, size = 0x4, scoped, tag = 'scoped memory for tpu_custom_call.1']
    #allocation10 [shape = 'u8[8192]{0}', space=vmem, size = 0x2000, scoped, tag = 'output window, operand 0']
    #allocation11 [shape = 'u8[32768]{0}', space=vmem, size = 0x8000, scoped, tag = 'output window, operand 1']
    #allocation12 [shape = 's32[2]{0}', space=sflag, size = 0x8, scoped, tag = 'scoped memory for tpu_custom_call.1']
    %11 = vsyncpa [#allocation6], 0
    %s12 = scalar_lea.sflag [#allocation6], 1
    %13 = vsyncpa %s12, 0
    %14 = vsyncpa [#allocation9], 0
    %15 = vsyncpa [#allocation7], 0
    %s16 = scalar_lea.sflag [#allocation7], 1
    %17 = vsyncpa %s16, 0
    %18 = vsyncpa [#allocation12], 0
    %s19 = scalar_lea.sflag [#allocation12], 1
    %20 = vsyncpa %s19, 0
    loop: start=0, step=1, limit=4
    $region2: #{tpu_custom_call.1} parent=1 // loop_pre_header
      _
    $region3: #{tpu_custom_call.1} parent=1 // loop_header
      %s22 = sphi 0, %s26
      %p23 = scmp.ge.s32.totalorder %s22, 4
      %s29 = sphi 0, %s48
      %s30 = sphi 0, %s44
      %s31 = sphi 0, %s40
      %s32 = sphi 0, %s29
      %s33 = sphi 0, %s30
      %s34 = sphi 0, %s31
      %s35 = sphi 0, %s32
      %s36 = sphi 0, %s33
      %s37 = sphi 0, %s34
      %s51 = sphi 0, %s53
      %s54 = sphi 0, %s51
      %s55 = sphi 0, %s54
      %s71 = sphi 0, %s55
      %s77 = sphi 0, %s79
      %s80 = sphi 0, %s77
      %s81 = sphi 0, %s80
      %s97 = sphi 0, %s81
      %s103 = sphi 0, %s105
      %s106 = sphi 0, %s103
      %s107 = sphi 0, %s106
      %s123 = sphi 0, %s107
      %s129 = sphi 0, %s131
      %s132 = sphi 0, %s129
      %s133 = sphi 0, %s132
      %s149 = sphi 0, %s133
      %s159 = sphi 0, %s161
      %s162 = sphi 0, %s159
      %s163 = sphi 0, %s162
      %s179 = sphi 0, %s163
      %s189 = sphi 0, %s191
      %s192 = sphi 0, %s189
      %s193 = sphi 0, %s192
      %s209 = sphi 0, %s193
    $region4: #{tpu_custom_call.1} parent=1 // loop_header_branch
      %25 = sbr.rel (%p23) target = $region8
    $region5: #{tpu_custom_call.1} parent=1 // loop_body
      %s27 = ssub.s32 %s22, 1
      %s28 = ssub.s32 %s22, 2
      %s38 = sadd.s32 1, %s31
      %p39 = scmp.ge.s32.totalorder %s38, 1
      %s40 = scalar_select %p39, 0, %s38
      %s41 = sadd.s32 1, %s30
      %s42 = scalar_select %p39, %s41, %s30
      %p43 = scmp.ge.s32.totalorder %s42, 1
      %s44 = scalar_select %p43, 0, %s42
      %s45 = sadd.s32 1, %s29
      %s46 = scalar_select %p43, %s45, %s29
      %p47 = scmp.ge.s32.totalorder %s46, 2
      %s48 = scalar_select %p47, 0, %s46
      %s49 = ssub.s32 %s29, %s48
      %p50 = scmp.eq.s32.totalorder %s49, 0
      %s52 = sadd.s32 %s51, 1
      %s53 = scalar_select %p50, %s51, %s52
      %p56 = pneg %p50
      %p57 = scmp.eq.s32.totalorder %s22, 1
      %p58 = por %p56, %p57
      %p59 = scmp.ne.s32.totalorder %s51, %s54
      %p60 = scmp.eq.s32.totalorder %s22, 0
      %p61 = por %p59, %p60
      %p62 = scmp.ne.s32.totalorder %s51, %s54
      %p63 = scmp.eq.s32.totalorder %s27, 1
      %p64 = por %p62, %p63
      %p65 = scmp.ne.s32.totalorder %s54, %s55
      %p66 = scmp.eq.s32.totalorder %s27, 0
      %p67 = por %p65, %p66
      %p68 = scmp.ne.s32.totalorder %s54, %s55
      %p69 = scmp.eq.s32.totalorder %s28, 1
      %p70 = por %p68, %p69
      %p72 = scmp.ne.s32.totalorder %s55, %s71
      %p73 = scmp.eq.s32.totalorder %s28, 0
      %p74 = por %p72, %p73
      %s75 = ssub.s32 %s29, %s48
      %p76 = scmp.eq.s32.totalorder %s75, 0
      %s78 = sadd.s32 %s77, 1
      %s79 = scalar_select %p76, %s77, %s78
      %p82 = pneg %p76
      %p83 = scmp.eq.s32.totalorder %s22, 1
      %p84 = por %p82, %p83
      %p85 = scmp.ne.s32.totalorder %s77, %s80
      %p86 = scmp.eq.s32.totalorder %s22, 0
      %p87 = por %p85, %p86
      %p88 = scmp.ne.s32.totalorder %s77, %s80
      %p89 = scmp.eq.s32.totalorder %s27, 1
      %p90 = por %p88, %p89
      %p91 = scmp.ne.s32.totalorder %s80, %s81
      %p92 = scmp.eq.s32.totalorder %s27, 0
      %p93 = por %p91, %p92
      %p94 = scmp.ne.s32.totalorder %s80, %s81
      %p95 = scmp.eq.s32.totalorder %s28, 1
      %p96 = por %p94, %p95
      %p98 = scmp.ne.s32.totalorder %s81, %s97
      %p99 = scmp.eq.s32.totalorder %s28, 0
      %p100 = por %p98, %p99
      %s101 = ssub.s32 %s30, %s44
      %p102 = scmp.eq.s32.totalorder %s101, 0
      %s104 = sadd.s32 %s103, 1
      %s105 = scalar_select %p102, %s103, %s104
      %p108 = pneg %p102
      %p109 = scmp.eq.s32.totalorder %s22, 1
      %p110 = por %p108, %p109
      %p111 = scmp.ne.s32.totalorder %s103, %s106
      %p112 = scmp.eq.s32.totalorder %s22, 0
      %p113 = por %p111, %p112
      %p114 = scmp.ne.s32.totalorder %s103, %s106
      %p115 = scmp.eq.s32.totalorder %s27, 1
      %p116 = por %p114, %p115
      %p117 = scmp.ne.s32.totalorder %s106, %s107
      %p118 = scmp.eq.s32.totalorder %s27, 0
      %p119 = por %p117, %p118
      %p120 = scmp.ne.s32.totalorder %s106, %s107
      %p121 = scmp.eq.s32.totalorder %s28, 1
      %p122 = por %p120, %p121
      %p124 = scmp.ne.s32.totalorder %s107, %s123
      %p125 = scmp.eq.s32.totalorder %s28, 0
      %p126 = por %p124, %p125
      %s127 = ssub.s32 %s30, %s44
      %p128 = scmp.eq.s32.totalorder %s127, 0
      %s130 = sadd.s32 %s129, 1
      %s131 = scalar_select %p128, %s129, %s130
      %p134 = pneg %p128
      %p135 = scmp.eq.s32.totalorder %s22, 1
      %p136 = por %p134, %p135
      %p137 = scmp.ne.s32.totalorder %s129, %s132
      %p138 = scmp.eq.s32.totalorder %s22, 0
      %p139 = por %p137, %p138
      %p140 = scmp.ne.s32.totalorder %s129, %s132
      %p141 = scmp.eq.s32.totalorder %s27, 1
      %p142 = por %p140, %p141
      %p143 = scmp.ne.s32.totalorder %s132, %s133
      %p144 = scmp.eq.s32.totalorder %s27, 0
      %p145 = por %p143, %p144
      %p146 = scmp.ne.s32.totalorder %s132, %s133
      %p147 = scmp.eq.s32.totalorder %s28, 1
      %p148 = por %p146, %p147
      %p150 = scmp.ne.s32.totalorder %s133, %s149
      %p151 = scmp.eq.s32.totalorder %s28, 0
      %p152 = por %p150, %p151
      %s153 = ssub.s32 %s29, %s48
      %s154 = ssub.s32 %s31, %s40
      %s155 = sor.u32 %s153, %s154
      %s156 = ssub.s32 %s30, %s44
      %s157 = sor.u32 %s155, %s156
      %p158 = scmp.eq.s32.totalorder %s157, 0
      %s160 = sadd.s32 %s159, 1
      %s161 = scalar_select %p158, %s159, %s160
      %p164 = pneg %p158
      %p165 = scmp.eq.s32.totalorder %s22, 1
      %p166 = por %p164, %p165
      %p167 = scmp.ne.s32.totalorder %s159, %s162
      %p168 = scmp.eq.s32.totalorder %s22, 0
      %p169 = por %p167, %p168
      %p170 = scmp.ne.s32.totalorder %s159, %s162
      %p171 = scmp.eq.s32.totalorder %s27, 1
      %p172 = por %p170, %p171
      %p173 = scmp.ne.s32.totalorder %s162, %s163
      %p174 = scmp.eq.s32.totalorder %s27, 0
      %p175 = por %p173, %p174
      %p176 = scmp.ne.s32.totalorder %s162, %s163
      %p177 = scmp.eq.s32.totalorder %s28, 1
      %p178 = por %p176, %p177
      %p180 = scmp.ne.s32.totalorder %s163, %s179
      %p181 = scmp.eq.s32.totalorder %s28, 0
      %p182 = por %p180, %p181
      %s183 = ssub.s32 %s29, %s48
      %s184 = ssub.s32 %s30, %s44
      %s185 = sor.u32 %s183, %s184
      %s186 = ssub.s32 %s31, %s40
      %s187 = sor.u32 %s185, %s186
      %p188 = scmp.eq.s32.totalorder %s187, 0
      %s190 = sadd.s32 %s189, 1
      %s191 = scalar_select %p188, %s189, %s190
      %p194 = pneg %p188
      %p195 = scmp.eq.s32.totalorder %s22, 1
      %p196 = por %p194, %p195
      %p197 = scmp.ne.s32.totalorder %s189, %s192
      %p198 = scmp.eq.s32.totalorder %s22, 0
      %p199 = por %p197, %p198
      %p200 = scmp.ne.s32.totalorder %s189, %s192
      %p201 = scmp.eq.s32.totalorder %s27, 1
      %p202 = por %p200, %p201
      %p203 = scmp.ne.s32.totalorder %s192, %s193
      %p204 = scmp.eq.s32.totalorder %s27, 0
      %p205 = por %p203, %p204
      %p206 = scmp.ne.s32.totalorder %s192, %s193
      %p207 = scmp.eq.s32.totalorder %s28, 1
      %p208 = por %p206, %p207
      %p210 = scmp.ne.s32.totalorder %s193, %s209
      %p211 = scmp.eq.s32.totalorder %s28, 0
      %p212 = por %p210, %p211
      %p213 = scmp.le.s32.totalorder 1, %s22
      %p214 = scmp.lt.s32.totalorder %s22, 3
      %p215 = pnand %p213, %p214
      %p216 = pneg %p215
      // Predicated region
      $region9: #{tpu_custom_call.1} parent=5 // pred_check
        _
      $region10: #{tpu_custom_call.1} parent=5 // pred_check_branch
        %218 = sbr.rel (%p215) target = $region12
      $region11: #{tpu_custom_call.1} parent=5 // pred_region
        %s219 = ssub.s32 %s22, 1
        // Predicated region
        $region13: #{tpu_custom_call.1} parent=11 // pred_check
          %p220 = pneg %p119
        $region14: #{tpu_custom_call.1} parent=11 // pred_check_branch
          %222 = sbr.rel (%p220) target = $region16
        $region15: #{tpu_custom_call.1} parent=11 // pred_region
          %s224 = ssub.s32 512, 512
          %225 = vsyncadd [#allocation9], %s224
          %s226 = smul.addr %s33, 4
          %s227 = smul.addr %s226, 128
          %s228 = scalar_lea.hbm %s2, %s227
          %s229 = sshll.u32 [#allocation8], 4
          %s230 = int_to_ptr.vmem [resolvable:$true] %s229
          %235 = dma.hbm_to_vmem [thread:$0]  %s228, 512, %s230, [#allocation9], 128, 128, 8
        $region16: #{tpu_custom_call.1} parent=11 // pred_fallthru
          _
        // Predicated region
        $region17: #{tpu_custom_call.1} parent=11 // pred_check
          %p236 = pneg %p145
        $region18: #{tpu_custom_call.1} parent=11 // pred_check_branch
          %238 = sbr.rel (%p236) target = $region20
        $region19: #{tpu_custom_call.1} parent=11 // pred_region
          %p239 = scmp.lt.s32.totalorder %s33, 0
          %s240 = scalar_select %p239, %s33, 0
          %s241 = scalar_lea.vmem %s3, %s240
        $region20: #{tpu_custom_call.1} parent=11 // pred_fallthru
          _
      $region12: #{tpu_custom_call.1} parent=5 // pred_fallthru
        _
      %p242 = scmp.lt.s32.totalorder %s22, 2
      // Predicated region
      $region21: #{tpu_custom_call.1} parent=5 // pred_check
        %p243 = pneg %p242
      $region22: #{tpu_custom_call.1} parent=5 // pred_check_branch
        %245 = sbr.rel (%p243) target = $region24
      $region23: #{tpu_custom_call.1} parent=5 // pred_region
        // Predicated region
        $region25: #{tpu_custom_call.1} parent=23 // pred_check
          %p246 = pneg %p61
        $region26: #{tpu_custom_call.1} parent=23 // pred_check_branch
          %248 = sbr.rel (%p246) target = $region28
        $region27: #{tpu_custom_call.1} parent=23 // pred_region
          %s249 = sand.u32 %s51, 1
          %s250 = scalar_lea.sflag [#allocation6], %s249
          %s251 = sand.u32 %s51, 1
          %s252 = smul.addr %s251, 8
          %s253 = scalar_lea.vmem [#allocation5], %s252
          %s255 = ssub.s32 128, 128
          %256 = vsyncadd %s250, %s255
          %s257 = smul.addr %s29, 128
          %s258 = scalar_lea.hbm %s0, %s257
          %s260 = sshll.u32 %s253, 4
          %s261 = int_to_ptr.vmem [resolvable:$true] %s260
          %263 = dma.hbm_to_vmem [thread:$0]  %s258, 128, %s261, %s250
        $region28: #{tpu_custom_call.1} parent=23 // pred_fallthru
          _
        // Predicated region
        $region29: #{tpu_custom_call.1} parent=23 // pred_check
          %p264 = pneg %p87
        $region30: #{tpu_custom_call.1} parent=23 // pred_check_branch
          %266 = sbr.rel (%p264) target = $region32
        $region31: #{tpu_custom_call.1} parent=23 // pred_region
          %p267 = scmp.lt.s32.totalorder %s29, 1
          %s268 = scalar_select %p267, %s29, 1
          %s269 = scalar_lea.vmem %s1, %s268
        $region32: #{tpu_custom_call.1} parent=23 // pred_fallthru
          _
      $region24: #{tpu_custom_call.1} parent=5 // pred_fallthru
        _
      %p270 = scmp.le.s32.totalorder 1, %s22
      %p271 = scmp.lt.s32.totalorder %s22, 3
      %p272 = pnand %p270, %p271
      %p273 = pneg %p272
      // Predicated region
      $region33: #{tpu_custom_call.1} parent=5 // pred_check
        _
      $region34: #{tpu_custom_call.1} parent=5 // pred_check_branch
        %275 = sbr.rel (%p272) target = $region36
      $region35: #{tpu_custom_call.1} parent=5 // pred_region
        %s276 = ssub.s32 %s22, 1
        %s277 = sand.u32 %s54, 1
        %s278 = scalar_lea.sflag [#allocation6], %s277
        %s279 = sand.u32 %s54, 1
        %s280 = smul.addr %s279, 8
        %s281 = scalar_lea.vmem [#allocation5], %s280
        // Predicated region
        $region37: #{tpu_custom_call.1} parent=35 // pred_check
          %p282 = pneg %p67
        $region38: #{tpu_custom_call.1} parent=35 // pred_check_branch
          %284 = sbr.rel (%p282) target = $region40
        $region39: #{tpu_custom_call.1} parent=35 // pred_region
          %285 = dma.done %s278, 128
        $region40: #{tpu_custom_call.1} parent=35 // pred_fallthru
          _
        // Predicated region
        $region41: #{tpu_custom_call.1} parent=35 // pred_check
          %p286 = pneg %p119
        $region42: #{tpu_custom_call.1} parent=35 // pred_check_branch
          %288 = sbr.rel (%p286) target = $region44
        $region43: #{tpu_custom_call.1} parent=35 // pred_region
          %289 = dma.done [#allocation9], 512
        $region44: #{tpu_custom_call.1} parent=35 // pred_fallthru
          _
        %s290 = sand.u32 %s54, 1
        %s291 = scalar_lea.sflag [#allocation6], %s290
        %s292 = sand.u32 %s54, 1
        %s293 = smul.addr %s292, 8
        %s294 = scalar_lea.vmem [#allocation5], %s293
        %p295 = pneg %p67
        %p296 = pneg %p64
        %p297 = scmp.lt.s32.totalorder %s32, 1
        %s298 = scalar_select %p297, %s32, 1
        %s299 = scalar_lea.vmem %s1, %s298
        %p300 = pneg %p93
        %p301 = pneg %p90
        %p302 = pneg %p119
        %p303 = pneg %p116
        %p304 = scmp.lt.s32.totalorder %s33, 0
        %s305 = scalar_select %p304, %s33, 0
        %s306 = scalar_lea.vmem %s3, %s305
        %p307 = pneg %p145
        %p308 = pneg %p142
        %p309 = pneg %p175
        %p310 = pneg %p172
        %s311 = sand.u32 %s162, 1
        %s312 = scalar_lea.sflag [#allocation7], %s311
        %s313 = sand.u32 %s162, 1
        %s314 = smul.addr %s313, 8
        %s315 = scalar_lea.vmem [#allocation10], %s314
        %p316 = pneg %p205
        %p317 = pneg %p202
        %s318 = sand.u32 %s192, 1
        %s319 = scalar_lea.sflag [#allocation12], %s318
        %s320 = sand.u32 %s192, 1
        %s321 = smul.addr %s320, 32
        %s322 = scalar_lea.vmem [#allocation11], %s321
        %p323 = scmp.lt.s32.totalorder %s32, 1
        %s324 = scalar_select %p323, %s32, 1
        %s325 = scalar_lea.vmem %s1, %s324
        %p326 = scmp.lt.s32.totalorder %s33, 0
        %s327 = scalar_select %p326, %s33, 0
        %s328 = scalar_lea.vmem %s3, %s327
        %s329 = smul.u32 4, %s33
        %p330 = scmp.eq.s32.totalorder %s34, 0
        // Predicated region
        $region45: #{tpu_custom_call.1} parent=35 // pred_check
          %p331 = pneg %p330
        $region46: #{tpu_custom_call.1} parent=35 // pred_check_branch
          %333 = sbr.rel (%p331) target = $region48
        $region47: #{tpu_custom_call.1} parent=35 // pred_region
          %v334 = vld [vmem:[%s281] sm:$0xff]
          %v335 = vld [vmem:[#allocation8] sm:$0xff]
          %v336 = vld [vmem:[#allocation8 + $0x8] sm:$0xff]
          %v337 = vld [vmem:[#allocation8 + $0x10] sm:$0xff]
          %v338 = vld [vmem:[#allocation8 + $0x18] sm:$0xff]
          %v339 = vld [vmem:[%s328] sm:$0x1]
          %v341 = vlaneseq
          %v342 = vshrl.u32 %v341, 7
          %v343 = vsub.s32 0, %v342
          %v344 = vrot.slane %v339, %v343
          %vm346 = vcmask 261120
          %v348 = vsel %vm346, %v334, 0
          %350 = vmatprep.subr.mxu0 0.0
          %351 = vmatpush1.msra.mxu0 %v335
          %352 = vmatprep.subr.mxu0 0.0
          %353 = vmatpush1.msra.mxu0 %v336
          %354 = vmatprep.subr.mxu0 0.0
          %355 = vmatpush1.msra.mxu0 %v337
          %356 = vmatprep.subr.mxu0 0.0
          %357 = vmatpush1.msra.mxu0 %v338
          %358 = vmatprep.subr.mxu0 0.0
          %359 = vmatpush1.msra.mxu0 0.0
          %360 = vmatprep.subr.mxu0 0.0
          %361 = vmatpush1.msra.mxu0 0.0
          %362 = vmatprep.subr.mxu0 0.0
          %363 = vmatpush1.msra.mxu0 0.0
          %364 = vmatprep.subr.mxu0 0.0
          %365 = vmatpush1.msra.mxu0 0.0
          %366 = vmatprep.subr.mxu0 0.0
          %367 = vmatpush1.msra.mxu0 0.0
          %368 = vmatprep.subr.mxu0 0.0
          %369 = vmatpush1.msra.mxu0 0.0
          %370 = vmatprep.subr.mxu0 0.0
          %371 = vmatpush1.msra.mxu0 0.0
          %372 = vmatprep.subr.mxu0 0.0
          %373 = vmatpush1.msra.mxu0 0.0
          %374 = vmatprep.subr.mxu0 0.0
          %375 = vmatpush1.msra.mxu0 0.0
          %376 = vmatprep.subr.mxu0 0.0
          %377 = vmatpush1.msra.mxu0 0.0
          %378 = vmatprep.subr.mxu0 0.0
          %379 = vmatpush1.msra.mxu0 0.0
          %380 = vmatprep.subr.mxu0 0.0
          %381 = vmatpush1.msra.mxu0 0.0
          %382 = vmatprep.subr.mxu0 0.0
          %383 = vmatpush1.msra.mxu0 0.0
          %384 = vmatprep.subr.mxu0 0.0
          %385 = vmatpush1.msra.mxu0 0.0
          %386 = vmatprep.subr.mxu0 0.0
          %387 = vmatpush1.msra.mxu0 0.0
          %388 = vmatprep.subr.mxu0 0.0
          %389 = vmatpush1.msra.mxu0 0.0
          %390 = vmatprep.subr.mxu0 0.0
          %391 = vmatpush1.msra.mxu0 0.0
          %392 = vmatprep.subr.mxu0 0.0
          %393 = vmatpush1.msra.mxu0 0.0
          %394 = vmatprep.subr.mxu0 0.0
          %395 = vmatpush1.msra.mxu0 0.0
          %396 = vmatprep.subr.mxu0 0.0
          %397 = vmatpush1.msra.mxu0 0.0
          %398 = vmatprep.subr.mxu0 0.0
          %399 = vmatpush1.msra.mxu0 0.0
          %400 = vmatprep.subr.mxu0 0.0
          %401 = vmatpush1.msra.mxu0 0.0
          %402 = vmatprep.subr.mxu0 0.0
          %403 = vmatpush1.msra.mxu0 0.0
          %404 = vmatprep.subr.mxu0 0.0
          %405 = vmatpush1.msra.mxu0 0.0
          %406 = vmatprep.subr.mxu0 0.0
          %407 = vmatpush1.msra.mxu0 0.0
          %408 = vmatprep.subr.mxu0 0.0
          %409 = vmatpush1.msra.mxu0 0.0
          %410 = vmatprep.subr.mxu0 0.0
          %411 = vmatpush1.msra.mxu0 0.0
          %412 = vmatprep.subr.mxu0 0.0
          %413 = vmatpush1.msra.mxu0 0.0
          %414 = vmatprep.mubr.f32.mxu0 0.0
          %415 = vmatmul.mubr.f32.gmra.mrb[0].mxu0 %v348
          %v416 = vpop.f32.mrb[0].mxu0
          %v417 = vadd.f32 %v344, %v416
          %v418 = vpop.f32.mrb[0].mxu0
          %419 = vdwg.mxu0
          %421 = vrot.lane.b32.xlu0 %v417, 120
          %v422 = vpop.permute.xlu0 %421
          %424 = vrot.lane.b32.xlu0 %v417, 112
          %v425 = vpop.permute.xlu0 %424
          %427 = vrot.lane.b32.xlu0 %v417, 104
          %v428 = vpop.permute.xlu0 %427
          %v430 = vcombine.low %v417, %v425
          %v431 = vcombine.high %v417, %v425
          %v433 = vunpack.c.l.s4 1983009808
          %v434 = vunpack.c.0.s8 %v433
          %v435 = vlaneseq
          %v436 = vshrl.u32 %v435, 7
          %v437 = vsub.s32 %v434, %v436
          %v438 = vrot.slane %v430, %v437
          %v440 = vunpack.c.l.s4 1983009808
          %v441 = vunpack.c.0.s8 %v440
          %v442 = vlaneseq
          %v443 = vshrl.u32 %v442, 7
          %v444 = vsub.s32 %v441, %v443
          %v445 = vrot.slane %v431, %v444
          %v446 = vcombine.low %v422, %v428
          %v447 = vcombine.high %v422, %v428
          %v449 = vunpack.c.l.s4 1983009808
          %v450 = vunpack.c.0.s8 %v449
          %v451 = vlaneseq
          %v452 = vshrl.u32 %v451, 7
          %v453 = vsub.s32 %v450, %v452
          %v454 = vrot.slane %v446, %v453
          %v456 = vunpack.c.l.s4 1983009808
          %v457 = vunpack.c.0.s8 %v456
          %v458 = vlaneseq
          %v459 = vshrl.u32 %v458, 7
          %v460 = vsub.s32 %v457, %v459
          %v461 = vrot.slane %v447, %v460
          %v462 = vcombine.low %v438, %v454
          %v463 = vcombine.high %v438, %v454
          %v465 = vunpack.c.l.s4 1934713408
          %v466 = vunpack.c.0.s8 %v465
          %v467 = vlaneseq
          %v468 = vshrl.u32 %v467, 7
          %v469 = vsub.s32 %v466, %v468
          %v470 = vrot.slane %v462, %v469
          %v472 = vunpack.c.l.s4 1934713408
          %v473 = vunpack.c.0.s8 %v472
          %v474 = vlaneseq
          %v475 = vshrl.u32 %v474, 7
          %v476 = vsub.s32 %v473, %v475
          %v477 = vrot.slane %v463, %v476
          %v478 = vcombine.low %v445, %v461
          %v479 = vcombine.high %v445, %v461
          %v481 = vunpack.c.l.s4 1934713408
          %v482 = vunpack.c.0.s8 %v481
          %v483 = vlaneseq
          %v484 = vshrl.u32 %v483, 7
          %v485 = vsub.s32 %v482, %v484
          %v486 = vrot.slane %v478, %v485
          %v488 = vunpack.c.l.s4 1934713408
          %v489 = vunpack.c.0.s8 %v488
          %v490 = vlaneseq
          %v491 = vshrl.u32 %v490, 7
          %v492 = vsub.s32 %v489, %v491
          %v493 = vrot.slane %v479, %v492
          %v494 = vcombine.high %v470, 0.0
          %v495 = vcombine.high %v477, 0.0
          %v496 = vcombine.high %v486, 0.0
          %v497 = vcombine.high %v493, 0.0
          %498 = vrot.lane.b32.xlu0 %v417, 96
          %v499 = vpop.permute.xlu0 %498
          %500 = vrot.lane.b32.xlu0 %v422, 96
          %v501 = vpop.permute.xlu0 %500
          %502 = vrot.lane.b32.xlu0 %v425, 96
          %v503 = vpop.permute.xlu0 %502
          %504 = vrot.lane.b32.xlu0 %v428, 96
          %v505 = vpop.permute.xlu0 %504
          %v510 = vcombine.low %v499, %v503
          %v511 = vcombine.high %v499, %v503
          %v513 = vunpack.c.l.s4 1983009808
          %v514 = vunpack.c.0.s8 %v513
          %v515 = vlaneseq
          %v516 = vshrl.u32 %v515, 7
          %v517 = vsub.s32 %v514, %v516
          %v518 = vrot.slane %v510, %v517
          %v520 = vunpack.c.l.s4 1983009808
          %v521 = vunpack.c.0.s8 %v520
          %v522 = vlaneseq
          %v523 = vshrl.u32 %v522, 7
          %v524 = vsub.s32 %v521, %v523
          %v525 = vrot.slane %v511, %v524
          %v526 = vcombine.low %v501, %v505
          %v527 = vcombine.high %v501, %v505
          %v529 = vunpack.c.l.s4 1983009808
          %v530 = vunpack.c.0.s8 %v529
          %v531 = vlaneseq
          %v532 = vshrl.u32 %v531, 7
          %v533 = vsub.s32 %v530, %v532
          %v534 = vrot.slane %v526, %v533
          %v536 = vunpack.c.l.s4 1983009808
          %v537 = vunpack.c.0.s8 %v536
          %v538 = vlaneseq
          %v539 = vshrl.u32 %v538, 7
          %v540 = vsub.s32 %v537, %v539
          %v541 = vrot.slane %v527, %v540
          %v542 = vcombine.low %v518, %v534
          %v543 = vcombine.high %v518, %v534
          %v545 = vunpack.c.l.s4 1934713408
          %v546 = vunpack.c.0.s8 %v545
          %v547 = vlaneseq
          %v548 = vshrl.u32 %v547, 7
          %v549 = vsub.s32 %v546, %v548
          %v550 = vrot.slane %v542, %v549
          %v552 = vunpack.c.l.s4 1934713408
          %v553 = vunpack.c.0.s8 %v552
          %v554 = vlaneseq
          %v555 = vshrl.u32 %v554, 7
          %v556 = vsub.s32 %v553, %v555
          %v557 = vrot.slane %v543, %v556
          %v558 = vcombine.low %v525, %v541
          %v559 = vcombine.high %v525, %v541
          %v561 = vunpack.c.l.s4 1934713408
          %v562 = vunpack.c.0.s8 %v561
          %v563 = vlaneseq
          %v564 = vshrl.u32 %v563, 7
          %v565 = vsub.s32 %v562, %v564
          %v566 = vrot.slane %v558, %v565
          %v568 = vunpack.c.l.s4 1934713408
          %v569 = vunpack.c.0.s8 %v568
          %v570 = vlaneseq
          %v571 = vshrl.u32 %v570, 7
          %v572 = vsub.s32 %v569, %v571
          %v573 = vrot.slane %v559, %v572
          %v574 = vcombine.high %v550, 0.0
          %v575 = vcombine.high %v557, 0.0
          %v576 = vcombine.high %v566, 0.0
          %v577 = vcombine.high %v573, 0.0
          %578 = vrot.lane.b32.xlu0 %v417, 64
          %v579 = vpop.permute.xlu0 %578
          %580 = vrot.lane.b32.xlu0 %v422, 64
          %v581 = vpop.permute.xlu0 %580
          %582 = vrot.lane.b32.xlu0 %v425, 64
          %v583 = vpop.permute.xlu0 %582
          %584 = vrot.lane.b32.xlu0 %v428, 64
          %v585 = vpop.permute.xlu0 %584
          %v590 = vcombine.low %v579, %v583
          %v591 = vcombine.high %v579, %v583
          %v593 = vunpack.c.l.s4 1983009808
          %v594 = vunpack.c.0.s8 %v593
          %v595 = vlaneseq
          %v596 = vshrl.u32 %v595, 7
          %v597 = vsub.s32 %v594, %v596
          %v598 = vrot.slane %v590, %v597
          %v600 = vunpack.c.l.s4 1983009808
          %v601 = vunpack.c.0.s8 %v600
          %v602 = vlaneseq
          %v603 = vshrl.u32 %v602, 7
          %v604 = vsub.s32 %v601, %v603
          %v605 = vrot.slane %v591, %v604
          %v606 = vcombine.low %v581, %v585
          %v607 = vcombine.high %v581, %v585
          %v609 = vunpack.c.l.s4 1983009808
          %v610 = vunpack.c.0.s8 %v609
          %v611 = vlaneseq
          %v612 = vshrl.u32 %v611, 7
          %v613 = vsub.s32 %v610, %v612
          %v614 = vrot.slane %v606, %v613
          %v616 = vunpack.c.l.s4 1983009808
          %v617 = vunpack.c.0.s8 %v616
          %v618 = vlaneseq
          %v619 = vshrl.u32 %v618, 7
          %v620 = vsub.s32 %v617, %v619
          %v621 = vrot.slane %v607, %v620
          %v622 = vcombine.low %v598, %v614
          %v623 = vcombine.high %v598, %v614
          %v625 = vunpack.c.l.s4 1934713408
          %v626 = vunpack.c.0.s8 %v625
          %v627 = vlaneseq
          %v628 = vshrl.u32 %v627, 7
          %v629 = vsub.s32 %v626, %v628
          %v630 = vrot.slane %v622, %v629
          %v632 = vunpack.c.l.s4 1934713408
          %v633 = vunpack.c.0.s8 %v632
          %v634 = vlaneseq
          %v635 = vshrl.u32 %v634, 7
          %v636 = vsub.s32 %v633, %v635
          %v637 = vrot.slane %v623, %v636
          %v638 = vcombine.low %v605, %v621
          %v639 = vcombine.high %v605, %v621
          %v641 = vunpack.c.l.s4 1934713408
          %v642 = vunpack.c.0.s8 %v641
          %v643 = vlaneseq
          %v644 = vshrl.u32 %v643, 7
          %v645 = vsub.s32 %v642, %v644
          %v646 = vrot.slane %v638, %v645
          %v648 = vunpack.c.l.s4 1934713408
          %v649 = vunpack.c.0.s8 %v648
          %v650 = vlaneseq
          %v651 = vshrl.u32 %v650, 7
          %v652 = vsub.s32 %v649, %v651
          %v653 = vrot.slane %v639, %v652
          %v654 = vcombine.high %v630, 0.0
          %v655 = vcombine.high %v637, 0.0
          %v656 = vcombine.high %v646, 0.0
          %v657 = vcombine.high %v653, 0.0
          %v658 = vcombine.low %v470, %v477
          %v660 = vunpack.c.l.s4 1983009808
          %v661 = vunpack.c.0.s8 %v660
          %v662 = vlaneseq
          %v663 = vshrl.u32 %v662, 7
          %v664 = vsub.s32 %v661, %v663
          %v665 = vrot.slane %v658, %v664
          %v666 = vcombine.low %v494, %v495
          %v668 = vunpack.c.l.s4 1983009808
          %v669 = vunpack.c.0.s8 %v668
          %v670 = vlaneseq
          %v671 = vshrl.u32 %v670, 7
          %v672 = vsub.s32 %v669, %v671
          %v673 = vrot.slane %v666, %v672
          %v674 = vcombine.low %v486, %v493
          %v676 = vunpack.c.l.s4 1983009808
          %v677 = vunpack.c.0.s8 %v676
          %v678 = vlaneseq
          %v679 = vshrl.u32 %v678, 7
          %v680 = vsub.s32 %v677, %v679
          %v681 = vrot.slane %v674, %v680
          %v682 = vcombine.low %v496, %v497
          %v684 = vunpack.c.l.s4 1983009808
          %v685 = vunpack.c.0.s8 %v684
          %v686 = vlaneseq
          %v687 = vshrl.u32 %v686, 7
          %v688 = vsub.s32 %v685, %v687
          %v689 = vrot.slane %v682, %v688
          %v690 = vcombine.low %v665, %v673
          %v691 = vcombine.high %v665, %v673
          %v693 = vunpack.c.l.s4 1934713408
          %v694 = vunpack.c.0.s8 %v693
          %v695 = vlaneseq
          %v696 = vshrl.u32 %v695, 7
          %v697 = vsub.s32 %v694, %v696
          %v698 = vrot.slane %v690, %v697
          %v700 = vunpack.c.l.s4 1934713408
          %v701 = vunpack.c.0.s8 %v700
          %v702 = vlaneseq
          %v703 = vshrl.u32 %v702, 7
          %v704 = vsub.s32 %v701, %v703
          %v705 = vrot.slane %v691, %v704
          %v706 = vcombine.low %v681, %v689
          %v707 = vcombine.high %v681, %v689
          %v709 = vunpack.c.l.s4 1934713408
          %v710 = vunpack.c.0.s8 %v709
          %v711 = vlaneseq
          %v712 = vshrl.u32 %v711, 7
          %v713 = vsub.s32 %v710, %v712
          %v714 = vrot.slane %v706, %v713
          %v716 = vunpack.c.l.s4 1934713408
          %v717 = vunpack.c.0.s8 %v716
          %v718 = vlaneseq
          %v719 = vshrl.u32 %v718, 7
          %v720 = vsub.s32 %v717, %v719
          %v721 = vrot.slane %v707, %v720
          %v722 = vcombine.low %v698, %v714
          %v723 = vcombine.high %v698, %v714
          %v724 = vcombine.low %v705, %v721
          %v725 = vcombine.high %v705, %v721
          %vm726 = vcmask 64512
          %727 = vst.msk [vmem:[#allocation2] sm:$0xff] %vm726, %v722
          %728 = vst.msk [vmem:[#allocation2 + $0x8] sm:$0xff] %vm726, %v723
          %729 = vst.msk [vmem:[#allocation2 + $0x10] sm:$0xff] %vm726, %v724
          %730 = vst.msk [vmem:[#allocation2 + $0x18] sm:$0xff] %vm726, %v725
          %v731 = vcombine.low %v550, %v557
          %v733 = vunpack.c.l.s4 1983009808
          %v734 = vunpack.c.0.s8 %v733
          %v735 = vlaneseq
          %v736 = vshrl.u32 %v735, 7
          %v737 = vsub.s32 %v734, %v736
          %v738 = vrot.slane %v731, %v737
          %v739 = vcombine.low %v574, %v575
          %v741 = vunpack.c.l.s4 1983009808
          %v742 = vunpack.c.0.s8 %v741
          %v743 = vlaneseq
          %v744 = vshrl.u32 %v743, 7
          %v745 = vsub.s32 %v742, %v744
          %v746 = vrot.slane %v739, %v745
          %v747 = vcombine.low %v566, %v573
          %v749 = vunpack.c.l.s4 1983009808
          %v750 = vunpack.c.0.s8 %v749
          %v751 = vlaneseq
          %v752 = vshrl.u32 %v751, 7
          %v753 = vsub.s32 %v750, %v752
          %v754 = vrot.slane %v747, %v753
          %v755 = vcombine.low %v576, %v577
          %v757 = vunpack.c.l.s4 1983009808
          %v758 = vunpack.c.0.s8 %v757
          %v759 = vlaneseq
          %v760 = vshrl.u32 %v759, 7
          %v761 = vsub.s32 %v758, %v760
          %v762 = vrot.slane %v755, %v761
          %v763 = vcombine.low %v738, %v746
          %v764 = vcombine.high %v738, %v746
          %v766 = vunpack.c.l.s4 1934713408
          %v767 = vunpack.c.0.s8 %v766
          %v768 = vlaneseq
          %v769 = vshrl.u32 %v768, 7
          %v770 = vsub.s32 %v767, %v769
          %v771 = vrot.slane %v763, %v770
          %v773 = vunpack.c.l.s4 1934713408
          %v774 = vunpack.c.0.s8 %v773
          %v775 = vlaneseq
          %v776 = vshrl.u32 %v775, 7
          %v777 = vsub.s32 %v774, %v776
          %v778 = vrot.slane %v764, %v777
          %v779 = vcombine.low %v754, %v762
          %v780 = vcombine.high %v754, %v762
          %v782 = vunpack.c.l.s4 1934713408
          %v783 = vunpack.c.0.s8 %v782
          %v784 = vlaneseq
          %v785 = vshrl.u32 %v784, 7
          %v786 = vsub.s32 %v783, %v785
          %v787 = vrot.slane %v779, %v786
          %v789 = vunpack.c.l.s4 1934713408
          %v790 = vunpack.c.0.s8 %v789
          %v791 = vlaneseq
          %v792 = vshrl.u32 %v791, 7
          %v793 = vsub.s32 %v790, %v792
          %v794 = vrot.slane %v780, %v793
          %v795 = vcombine.low %v771, %v787
          %v796 = vcombine.high %v771, %v787
          %v797 = vcombine.low %v778, %v794
          %v798 = vcombine.high %v778, %v794
          %799 = vst.msk [vmem:[#allocation3] sm:$0xff] %vm726, %v795
          %800 = vst.msk [vmem:[#allocation3 + $0x8] sm:$0xff] %vm726, %v796
          %801 = vst.msk [vmem:[#allocation3 + $0x10] sm:$0xff] %vm726, %v797
          %802 = vst.msk [vmem:[#allocation3 + $0x18] sm:$0xff] %vm726, %v798
          %v803 = vcombine.low %v630, %v637
          %v805 = vunpack.c.l.s4 1983009808
          %v806 = vunpack.c.0.s8 %v805
          %v807 = vlaneseq
          %v808 = vshrl.u32 %v807, 7
          %v809 = vsub.s32 %v806, %v808
          %v810 = vrot.slane %v803, %v809
          %v811 = vcombine.low %v654, %v655
          %v813 = vunpack.c.l.s4 1983009808
          %v814 = vunpack.c.0.s8 %v813
          %v815 = vlaneseq
          %v816 = vshrl.u32 %v815, 7
          %v817 = vsub.s32 %v814, %v816
          %v818 = vrot.slane %v811, %v817
          %v819 = vcombine.low %v646, %v653
          %v821 = vunpack.c.l.s4 1983009808
          %v822 = vunpack.c.0.s8 %v821
          %v823 = vlaneseq
          %v824 = vshrl.u32 %v823, 7
          %v825 = vsub.s32 %v822, %v824
          %v826 = vrot.slane %v819, %v825
          %v827 = vcombine.low %v656, %v657
          %v829 = vunpack.c.l.s4 1983009808
          %v830 = vunpack.c.0.s8 %v829
          %v831 = vlaneseq
          %v832 = vshrl.u32 %v831, 7
          %v833 = vsub.s32 %v830, %v832
          %v834 = vrot.slane %v827, %v833
          %v835 = vcombine.low %v810, %v818
          %v836 = vcombine.high %v810, %v818
          %v838 = vunpack.c.l.s4 1934713408
          %v839 = vunpack.c.0.s8 %v838
          %v840 = vlaneseq
          %v841 = vshrl.u32 %v840, 7
          %v842 = vsub.s32 %v839, %v841
          %v843 = vrot.slane %v835, %v842
          %v845 = vunpack.c.l.s4 1934713408
          %v846 = vunpack.c.0.s8 %v845
          %v847 = vlaneseq
          %v848 = vshrl.u32 %v847, 7
          %v849 = vsub.s32 %v846, %v848
          %v850 = vrot.slane %v836, %v849
          %v851 = vcombine.low %v826, %v834
          %v852 = vcombine.high %v826, %v834
          %v854 = vunpack.c.l.s4 1934713408
          %v855 = vunpack.c.0.s8 %v854
          %v856 = vlaneseq
          %v857 = vshrl.u32 %v856, 7
          %v858 = vsub.s32 %v855, %v857
          %v859 = vrot.slane %v851, %v858
          %v861 = vunpack.c.l.s4 1934713408
          %v862 = vunpack.c.0.s8 %v861
          %v863 = vlaneseq
          %v864 = vshrl.u32 %v863, 7
          %v865 = vsub.s32 %v862, %v864
          %v866 = vrot.slane %v852, %v865
          %v867 = vcombine.low %v843, %v859
          %v868 = vcombine.high %v843, %v859
          %v869 = vcombine.low %v850, %v866
          %v870 = vcombine.high %v850, %v866
          %871 = vst.msk [vmem:[#allocation4] sm:$0xff] %vm726, %v867
          %872 = vst.msk [vmem:[#allocation4 + $0x8] sm:$0xff] %vm726, %v868
          %873 = vst.msk [vmem:[#allocation4 + $0x10] sm:$0xff] %vm726, %v869
          %874 = vst.msk [vmem:[#allocation4 + $0x18] sm:$0xff] %vm726, %v870
        $region48: #{tpu_custom_call.1} parent=35 // pred_fallthru
          _
        %v875 = vld [vmem:[%s325] sm:$0x1]
        %s876 = smul.u32 %s34, 8
        %s877 = scalar_lea.vmem [#allocation2], %s876
        %v878 = vld [vmem:[%s877] sm:$0xff]
        %v879 = vld [vmem:[%s877 + $0x8] sm:$0xff]
        %v880 = vld [vmem:[%s877 + $0x10] sm:$0xff]
        %v881 = vld [vmem:[%s877 + $0x18] sm:$0xff]
        %v882 = vld [vmem:[#allocation3] sm:$0xff]
        %v883 = vld [vmem:[#allocation3 + $0x8] sm:$0xff]
        %v884 = vld [vmem:[#allocation3 + $0x10] sm:$0xff]
        %v885 = vld [vmem:[#allocation3 + $0x18] sm:$0xff]
        %v886 = vld [vmem:[#allocation4] sm:$0xff]
        %v887 = vld [vmem:[#allocation4 + $0x8] sm:$0xff]
        %v888 = vld [vmem:[#allocation4 + $0x10] sm:$0xff]
        %v889 = vld [vmem:[#allocation4 + $0x18] sm:$0xff]
        %vm890 = vcmask 64512
        %v892 = vsel %vm890, %v878, 0
        %v895 = vsel %vm890, %v882, 0
        %897 = vmatprep.subr.mxu0 0.0
        %898 = vmatpush1.xpose.msra.mxu0 %v895
        %899 = vmatprep.subr.mxu0 0.0
        %900 = vmatpush1.xpose.msra.mxu0 0.0
        %901 = vmatprep.subr.mxu0 0.0
        %902 = vmatpush1.xpose.msra.mxu0 0.0
        %903 = vmatprep.subr.mxu0 0.0
        %904 = vmatpush1.xpose.msra.mxu0 0.0
        %905 = vmatprep.subr.mxu0 0.0
        %906 = vmatpush1.xpose.msra.mxu0 0.0
        %907 = vmatprep.subr.mxu0 0.0
        %908 = vmatpush1.xpose.msra.mxu0 0.0
        %909 = vmatprep.subr.mxu0 0.0
        %910 = vmatpush1.xpose.msra.mxu0 0.0
        %911 = vmatprep.subr.mxu0 0.0
        %912 = vmatpush1.xpose.msra.mxu0 0.0
        %913 = vmatprep.subr.mxu0 0.0
        %914 = vmatpush1.xpose.msra.mxu0 0.0
        %915 = vmatprep.subr.mxu0 0.0
        %916 = vmatpush1.xpose.msra.mxu0 0.0
        %917 = vmatprep.subr.mxu0 0.0
        %918 = vmatpush1.xpose.msra.mxu0 0.0
        %919 = vmatprep.subr.mxu0 0.0
        %920 = vmatpush1.xpose.msra.mxu0 0.0
        %921 = vmatprep.subr.mxu0 0.0
        %922 = vmatpush1.xpose.msra.mxu0 0.0
        %923 = vmatprep.subr.mxu0 0.0
        %924 = vmatpush1.xpose.msra.mxu0 0.0
        %925 = vmatprep.subr.mxu0 0.0
        %926 = vmatpush1.xpose.msra.mxu0 0.0
        %927 = vmatprep.subr.mxu0 0.0
        %928 = vmatpush1.xpose.msra.mxu0 0.0
        %929 = vmatprep.subr.mxu0 0.0
        %930 = vmatpush1.xpose.msra.mxu0 0.0
        %931 = vmatprep.subr.mxu0 0.0
        %932 = vmatpush1.xpose.msra.mxu0 0.0
        %933 = vmatprep.subr.mxu0 0.0
        %934 = vmatpush1.xpose.msra.mxu0 0.0
        %935 = vmatprep.subr.mxu0 0.0
        %936 = vmatpush1.xpose.msra.mxu0 0.0
        %937 = vmatprep.subr.mxu0 0.0
        %938 = vmatpush1.xpose.msra.mxu0 0.0
        %939 = vmatprep.subr.mxu0 0.0
        %940 = vmatpush1.xpose.msra.mxu0 0.0
        %941 = vmatprep.subr.mxu0 0.0
        %942 = vmatpush1.xpose.msra.mxu0 0.0
        %943 = vmatprep.subr.mxu0 0.0
        %944 = vmatpush1.xpose.msra.mxu0 0.0
        %945 = vmatprep.subr.mxu0 0.0
        %946 = vmatpush1.xpose.msra.mxu0 0.0
        %947 = vmatprep.subr.mxu0 0.0
        %948 = vmatpush1.xpose.msra.mxu0 0.0
        %949 = vmatprep.subr.mxu0 0.0
        %950 = vmatpush1.xpose.msra.mxu0 0.0
        %951 = vmatprep.subr.mxu0 0.0
        %952 = vmatpush1.xpose.msra.mxu0 0.0
        %953 = vmatprep.subr.mxu0 0.0
        %954 = vmatpush1.xpose.msra.mxu0 0.0
        %955 = vmatprep.subr.mxu0 0.0
        %956 = vmatpush1.xpose.msra.mxu0 0.0
        %957 = vmatprep.subr.mxu0 0.0
        %958 = vmatpush1.xpose.msra.mxu0 0.0
        %959 = vmatprep.subr.mxu0 0.0
        %960 = vmatpush1.xpose.msra.mxu0 0.0
        %961 = vmatprep.mubr.f32.mxu0 0.0
        %962 = vmatmul.mubr.f32.gmra.mrb[0].mxu0 %v892
        %v963 = vpop.f32.mrb[0].mxu0
        %v964 = vadd.f32 0.0, %v963
        %v965 = vpop.f32.mrb[0].mxu0
        %966 = vdwg.mxu0
        %v968 = vsel %vm890, %v879, 0
        %v971 = vsel %vm890, %v883, 0
        %973 = vmatprep.subr.mxu0 0.0
        %974 = vmatpush1.xpose.msra.mxu0 %v971
        %975 = vmatprep.subr.mxu0 0.0
        %976 = vmatpush1.xpose.msra.mxu0 0.0
        %977 = vmatprep.subr.mxu0 0.0
        %978 = vmatpush1.xpose.msra.mxu0 0.0
        %979 = vmatprep.subr.mxu0 0.0
        %980 = vmatpush1.xpose.msra.mxu0 0.0
        %981 = vmatprep.subr.mxu0 0.0
        %982 = vmatpush1.xpose.msra.mxu0 0.0
        %983 = vmatprep.subr.mxu0 0.0
        %984 = vmatpush1.xpose.msra.mxu0 0.0
        %985 = vmatprep.subr.mxu0 0.0
        %986 = vmatpush1.xpose.msra.mxu0 0.0
        %987 = vmatprep.subr.mxu0 0.0
        %988 = vmatpush1.xpose.msra.mxu0 0.0
        %989 = vmatprep.subr.mxu0 0.0
        %990 = vmatpush1.xpose.msra.mxu0 0.0
        %991 = vmatprep.subr.mxu0 0.0
        %992 = vmatpush1.xpose.msra.mxu0 0.0
        %993 = vmatprep.subr.mxu0 0.0
        %994 = vmatpush1.xpose.msra.mxu0 0.0
        %995 = vmatprep.subr.mxu0 0.0
        %996 = vmatpush1.xpose.msra.mxu0 0.0
        %997 = vmatprep.subr.mxu0 0.0
        %998 = vmatpush1.xpose.msra.mxu0 0.0
        %999 = vmatprep.subr.mxu0 0.0
        %1000 = vmatpush1.xpose.msra.mxu0 0.0
        %1001 = vmatprep.subr.mxu0 0.0
        %1002 = vmatpush1.xpose.msra.mxu0 0.0
        %1003 = vmatprep.subr.mxu0 0.0
        %1004 = vmatpush1.xpose.msra.mxu0 0.0
        %1005 = vmatprep.subr.mxu0 0.0
        %1006 = vmatpush1.xpose.msra.mxu0 0.0
        %1007 = vmatprep.subr.mxu0 0.0
        %1008 = vmatpush1.xpose.msra.mxu0 0.0
        %1009 = vmatprep.subr.mxu0 0.0
        %1010 = vmatpush1.xpose.msra.mxu0 0.0
        %1011 = vmatprep.subr.mxu0 0.0
        %1012 = vmatpush1.xpose.msra.mxu0 0.0
        %1013 = vmatprep.subr.mxu0 0.0
        %1014 = vmatpush1.xpose.msra.mxu0 0.0
        %1015 = vmatprep.subr.mxu0 0.0
        %1016 = vmatpush1.xpose.msra.mxu0 0.0
        %1017 = vmatprep.subr.mxu0 0.0
        %1018 = vmatpush1.xpose.msra.mxu0 0.0
        %1019 = vmatprep.subr.mxu0 0.0
        %1020 = vmatpush1.xpose.msra.mxu0 0.0
        %1021 = vmatprep.subr.mxu0 0.0
        %1022 = vmatpush1.xpose.msra.mxu0 0.0
        %1023 = vmatprep.subr.mxu0 0.0
        %1024 = vmatpush1.xpose.msra.mxu0 0.0
        %1025 = vmatprep.subr.mxu0 0.0
        %1026 = vmatpush1.xpose.msra.mxu0 0.0
        %1027 = vmatprep.subr.mxu0 0.0
        %1028 = vmatpush1.xpose.msra.mxu0 0.0
        %1029 = vmatprep.subr.mxu0 0.0
        %1030 = vmatpush1.xpose.msra.mxu0 0.0
        %1031 = vmatprep.subr.mxu0 0.0
        %1032 = vmatpush1.xpose.msra.mxu0 0.0
        %1033 = vmatprep.subr.mxu0 0.0
        %1034 = vmatpush1.xpose.msra.mxu0 0.0
        %1035 = vmatprep.subr.mxu0 0.0
        %1036 = vmatpush1.xpose.msra.mxu0 0.0
        %1037 = vmatprep.mubr.f32.mxu0 0.0
        %1038 = vmatmul.mubr.f32.gmra.mrb[0].mxu0 %v968
        %v1039 = vpop.f32.mrb[0].mxu0
        %v1040 = vadd.f32 0.0, %v1039
        %v1041 = vpop.f32.mrb[0].mxu0
        %1042 = vdwg.mxu0
        %v1044 = vsel %vm890, %v880, 0
        %v1047 = vsel %vm890, %v884, 0
        %1049 = vmatprep.subr.mxu0 0.0
        %1050 = vmatpush1.xpose.msra.mxu0 %v1047
        %1051 = vmatprep.subr.mxu0 0.0
        %1052 = vmatpush1.xpose.msra.mxu0 0.0
        %1053 = vmatprep.subr.mxu0 0.0
        %1054 = vmatpush1.xpose.msra.mxu0 0.0
        %1055 = vmatprep.subr.mxu0 0.0
        %1056 = vmatpush1.xpose.msra.mxu0 0.0
        %1057 = vmatprep.subr.mxu0 0.0
        %1058 = vmatpush1.xpose.msra.mxu0 0.0
        %1059 = vmatprep.subr.mxu0 0.0
        %1060 = vmatpush1.xpose.msra.mxu0 0.0
        %1061 = vmatprep.subr.mxu0 0.0
        %1062 = vmatpush1.xpose.msra.mxu0 0.0
        %1063 = vmatprep.subr.mxu0 0.0
        %1064 = vmatpush1.xpose.msra.mxu0 0.0
        %1065 = vmatprep.subr.mxu0 0.0
        %1066 = vmatpush1.xpose.msra.mxu0 0.0
        %1067 = vmatprep.subr.mxu0 0.0
        %1068 = vmatpush1.xpose.msra.mxu0 0.0
        %1069 = vmatprep.subr.mxu0 0.0
        %1070 = vmatpush1.xpose.msra.mxu0 0.0
        %1071 = vmatprep.subr.mxu0 0.0
        %1072 = vmatpush1.xpose.msra.mxu0 0.0
        %1073 = vmatprep.subr.mxu0 0.0
        %1074 = vmatpush1.xpose.msra.mxu0 0.0
        %1075 = vmatprep.subr.mxu0 0.0
        %1076 = vmatpush1.xpose.msra.mxu0 0.0
        %1077 = vmatprep.subr.mxu0 0.0
        %1078 = vmatpush1.xpose.msra.mxu0 0.0
        %1079 = vmatprep.subr.mxu0 0.0
        %1080 = vmatpush1.xpose.msra.mxu0 0.0
        %1081 = vmatprep.subr.mxu0 0.0
        %1082 = vmatpush1.xpose.msra.mxu0 0.0
        %1083 = vmatprep.subr.mxu0 0.0
        %1084 = vmatpush1.xpose.msra.mxu0 0.0
        %1085 = vmatprep.subr.mxu0 0.0
        %1086 = vmatpush1.xpose.msra.mxu0 0.0
        %1087 = vmatprep.subr.mxu0 0.0
        %1088 = vmatpush1.xpose.msra.mxu0 0.0
        %1089 = vmatprep.subr.mxu0 0.0
        %1090 = vmatpush1.xpose.msra.mxu0 0.0
        %1091 = vmatprep.subr.mxu0 0.0
        %1092 = vmatpush1.xpose.msra.mxu0 0.0
        %1093 = vmatprep.subr.mxu0 0.0
        %1094 = vmatpush1.xpose.msra.mxu0 0.0
        %1095 = vmatprep.subr.mxu0 0.0
        %1096 = vmatpush1.xpose.msra.mxu0 0.0
        %1097 = vmatprep.subr.mxu0 0.0
        %1098 = vmatpush1.xpose.msra.mxu0 0.0
        %1099 = vmatprep.subr.mxu0 0.0
        %1100 = vmatpush1.xpose.msra.mxu0 0.0
        %1101 = vmatprep.subr.mxu0 0.0
        %1102 = vmatpush1.xpose.msra.mxu0 0.0
        %1103 = vmatprep.subr.mxu0 0.0
        %1104 = vmatpush1.xpose.msra.mxu0 0.0
        %1105 = vmatprep.subr.mxu0 0.0
        %1106 = vmatpush1.xpose.msra.mxu0 0.0
        %1107 = vmatprep.subr.mxu0 0.0
        %1108 = vmatpush1.xpose.msra.mxu0 0.0
        %1109 = vmatprep.subr.mxu0 0.0
        %1110 = vmatpush1.xpose.msra.mxu0 0.0
        %1111 = vmatprep.subr.mxu0 0.0
        %1112 = vmatpush1.xpose.msra.mxu0 0.0
        %1113 = vmatprep.mubr.f32.mxu0 0.0
        %1114 = vmatmul.mubr.f32.gmra.mrb[0].mxu0 %v1044
        %v1115 = vpop.f32.mrb[0].mxu0
        %v1116 = vadd.f32 0.0, %v1115
        %v1117 = vpop.f32.mrb[0].mxu0
        %1118 = vdwg.mxu0
        %v1120 = vsel %vm890, %v881, 0
        %v1123 = vsel %vm890, %v885, 0
        %1125 = vmatprep.subr.mxu0 0.0
        %1126 = vmatpush1.xpose.msra.mxu0 %v1123
        %1127 = vmatprep.subr.mxu0 0.0
        %1128 = vmatpush1.xpose.msra.mxu0 0.0
        %1129 = vmatprep.subr.mxu0 0.0
        %1130 = vmatpush1.xpose.msra.mxu0 0.0
        %1131 = vmatprep.subr.mxu0 0.0
        %1132 = vmatpush1.xpose.msra.mxu0 0.0
        %1133 = vmatprep.subr.mxu0 0.0
        %1134 = vmatpush1.xpose.msra.mxu0 0.0
        %1135 = vmatprep.subr.mxu0 0.0
        %1136 = vmatpush1.xpose.msra.mxu0 0.0
        %1137 = vmatprep.subr.mxu0 0.0
        %1138 = vmatpush1.xpose.msra.mxu0 0.0
        %1139 = vmatprep.subr.mxu0 0.0
        %1140 = vmatpush1.xpose.msra.mxu0 0.0
        %1141 = vmatprep.subr.mxu0 0.0
        %1142 = vmatpush1.xpose.msra.mxu0 0.0
        %1143 = vmatprep.subr.mxu0 0.0
        %1144 = vmatpush1.xpose.msra.mxu0 0.0
        %1145 = vmatprep.subr.mxu0 0.0
        %1146 = vmatpush1.xpose.msra.mxu0 0.0
        %1147 = vmatprep.subr.mxu0 0.0
        %1148 = vmatpush1.xpose.msra.mxu0 0.0
        %1149 = vmatprep.subr.mxu0 0.0
        %1150 = vmatpush1.xpose.msra.mxu0 0.0
        %1151 = vmatprep.subr.mxu0 0.0
        %1152 = vmatpush1.xpose.msra.mxu0 0.0
        %1153 = vmatprep.subr.mxu0 0.0
        %1154 = vmatpush1.xpose.msra.mxu0 0.0
        %1155 = vmatprep.subr.mxu0 0.0
        %1156 = vmatpush1.xpose.msra.mxu0 0.0
        %1157 = vmatprep.subr.mxu0 0.0
        %1158 = vmatpush1.xpose.msra.mxu0 0.0
        %1159 = vmatprep.subr.mxu0 0.0
        %1160 = vmatpush1.xpose.msra.mxu0 0.0
        %1161 = vmatprep.subr.mxu0 0.0
        %1162 = vmatpush1.xpose.msra.mxu0 0.0
        %1163 = vmatprep.subr.mxu0 0.0
        %1164 = vmatpush1.xpose.msra.mxu0 0.0
        %1165 = vmatprep.subr.mxu0 0.0
        %1166 = vmatpush1.xpose.msra.mxu0 0.0
        %1167 = vmatprep.subr.mxu0 0.0
        %1168 = vmatpush1.xpose.msra.mxu0 0.0
        %1169 = vmatprep.subr.mxu0 0.0
        %1170 = vmatpush1.xpose.msra.mxu0 0.0
        %1171 = vmatprep.subr.mxu0 0.0
        %1172 = vmatpush1.xpose.msra.mxu0 0.0
        %1173 = vmatprep.subr.mxu0 0.0
        %1174 = vmatpush1.xpose.msra.mxu0 0.0
        %1175 = vmatprep.subr.mxu0 0.0
        %1176 = vmatpush1.xpose.msra.mxu0 0.0
        %1177 = vmatprep.subr.mxu0 0.0
        %1178 = vmatpush1.xpose.msra.mxu0 0.0
        %1179 = vmatprep.subr.mxu0 0.0
        %1180 = vmatpush1.xpose.msra.mxu0 0.0
        %1181 = vmatprep.subr.mxu0 0.0
        %1182 = vmatpush1.xpose.msra.mxu0 0.0
        %1183 = vmatprep.subr.mxu0 0.0
        %1184 = vmatpush1.xpose.msra.mxu0 0.0
        %1185 = vmatprep.subr.mxu0 0.0
        %1186 = vmatpush1.xpose.msra.mxu0 0.0
        %1187 = vmatprep.subr.mxu0 0.0
        %1188 = vmatpush1.xpose.msra.mxu0 0.0
        %1189 = vmatprep.mubr.f32.mxu0 0.0
        %1190 = vmatmul.mubr.f32.gmra.mrb[0].mxu0 %v1120
        %v1191 = vpop.f32.mrb[0].mxu0
        %v1192 = vadd.f32 0.0, %v1191
        %v1193 = vpop.f32.mrb[0].mxu0
        %1194 = vdwg.mxu0
        %v1195 = vmul.f32 %v964, 0.35355338
        %v1196 = vmul.f32 %v1040, 0.35355338
        %v1197 = vmul.f32 %v1116, 0.35355338
        %v1198 = vmul.f32 %v1192, 0.35355338
        %v1200 = vlaneseq
        %v1201 = vshrl.u32 %v1200, 7
        %v1202 = vsub.s32 0, %v1201
        %v1203 = vrot.slane %v875, %v1202
        %v1205 = vadd.f32 %v1195, %v1203
        %v1206 = vadd.f32 %v1196, %v1203
        %v1207 = vadd.f32 %v1197, %v1203
        %v1208 = vadd.f32 %v1198, %v1203
        %v1209 = vsel %vm890, %v1205, -inf
        %1210 = vmax.xlane.f32.xlu0 %v1209
        %v1211 = vpop.xlane.xlu0 %1210
        %v1212 = vsel %vm890, %v1206, -inf
        %1213 = vmax.xlane.f32.xlu0 %v1212
        %v1214 = vpop.xlane.xlu0 %1213
        %v1215 = vsel %vm890, %v1207, -inf
        %1216 = vmax.xlane.f32.xlu0 %v1215
        %v1217 = vpop.xlane.xlu0 %1216
        %v1218 = vsel %vm890, %v1208, -inf
        %1219 = vmax.xlane.f32.xlu0 %v1218
        %v1220 = vpop.xlane.xlu0 %1219
        %v1221 = vsub.f32 %v1205, %v1211
        %v1222 = vsub.f32 %v1206, %v1214
        %v1223 = vsub.f32 %v1207, %v1217
        %v1224 = vsub.f32 %v1208, %v1220
        %v1225 = vmul.f32 %v1221, 1.442695
        %v1226 = vpow.pop %v1225
        %v1227 = vmul.f32 %v1222, 1.442695
        %v1228 = vpow.pop %v1227
        %v1229 = vmul.f32 %v1223, 1.442695
        %v1230 = vpow.pop %v1229
        %v1231 = vmul.f32 %v1224, 1.442695
        %v1232 = vpow.pop %v1231
        %v1233 = vsel %vm890, %v1226, 0.0
        %1234 = vadd.xlane.f32.xlu0 %v1233
        %v1235 = vpop.xlane.xlu0 %1234
        %v1236 = vsel %vm890, %v1228, 0.0
        %1237 = vadd.xlane.f32.xlu0 %v1236
        %v1238 = vpop.xlane.xlu0 %1237
        %v1239 = vsel %vm890, %v1230, 0.0
        %1240 = vadd.xlane.f32.xlu0 %v1239
        %v1241 = vpop.xlane.xlu0 %1240
        %v1242 = vsel %vm890, %v1232, 0.0
        %1243 = vadd.xlane.f32.xlu0 %v1242
        %v1244 = vpop.xlane.xlu0 %1243
        %v1245 = vrcp.pop %v1235
        %v1246 = vrcp.pop %v1238
        %v1247 = vrcp.pop %v1241
        %v1248 = vrcp.pop %v1244
        %v1249 = vmul.f32 %v1235, %v1245
        %v1250 = vmul.f32 %v1238, %v1246
        %v1251 = vmul.f32 %v1241, %v1247
        %v1252 = vmul.f32 %v1244, %v1248
        %v1253 = vsub.f32 2.0, %v1249
        %v1254 = vsub.f32 2.0, %v1250
        %v1255 = vsub.f32 2.0, %v1251
        %v1256 = vsub.f32 2.0, %v1252
        %v1257 = vmul.f32 %v1245, %v1253
        %v1258 = vmul.f32 %v1246, %v1254
        %v1259 = vmul.f32 %v1247, %v1255
        %v1260 = vmul.f32 %v1248, %v1256
        %v1261 = vmul.f32 %v1226, %v1257
        %v1262 = vmul.f32 %v1228, %v1258
        %v1263 = vmul.f32 %v1230, %v1259
        %v1264 = vmul.f32 %v1232, %v1260
        %1265 = vst.msk [vmem:[%s322] sm:$0xff] %vm890, %v1261
        %1266 = vst.msk [vmem:[%s322 + $0x8] sm:$0xff] %vm890, %v1262
        %1267 = vst.msk [vmem:[%s322 + $0x10] sm:$0xff] %vm890, %v1263
        %1268 = vst.msk [vmem:[%s322 + $0x18] sm:$0xff] %vm890, %v1264
        %1269 = vxpose.xlu0.b32.start [1/16] %v886, 128
        %1270 = vxpose.xlu0.b32.cont [2/16] 0.0, 128
        %1271 = vxpose.xlu0.b32.cont [3/16] 0.0, 128
        %1272 = vxpose.xlu0.b32.cont [4/16] 0.0, 128
        %1273 = vxpose.xlu0.b32.cont [5/16] 0.0, 128
        %1274 = vxpose.xlu0.b32.cont [6/16] 0.0, 128
        %1275 = vxpose.xlu0.b32.cont [7/16] 0.0, 128
        %1276 = vxpose.xlu0.b32.cont [8/16] 0.0, 128
        %1277 = vxpose.xlu0.b32.cont [9/16] 0.0, 128
        %1278 = vxpose.xlu0.b32.cont [10/16] 0.0, 128
        %1279 = vxpose.xlu0.b32.cont [11/16] 0.0, 128
        %1280 = vxpose.xlu0.b32.cont [12/16] 0.0, 128
        %1281 = vxpose.xlu0.b32.cont [13/16] 0.0, 128
        %1282 = vxpose.xlu0.b32.cont [14/16] 0.0, 128
        %1283 = vxpose.xlu0.b32.cont [15/16] 0.0, 128
        %1284 = vxpose.xlu0.b32.end [16/16] 0.0, 128
        %v1285 = vpop.trf.xlu0
        %v1286 = vpop.trf.xlu0
        %v1287 = vpop.trf.xlu0
        %v1288 = vpop.trf.xlu0
        %v1289 = vpop.trf.xlu0
        %v1290 = vpop.trf.xlu0
        %v1291 = vpop.trf.xlu0
        %v1292 = vpop.trf.xlu0
        %v1293 = vpop.trf.xlu0
        %v1294 = vpop.trf.xlu0
        %v1295 = vpop.trf.xlu0
        %v1296 = vpop.trf.xlu0
        %v1297 = vpop.trf.xlu0
        %v1298 = vpop.trf.xlu0
        %v1299 = vpop.trf.xlu0
        %v1300 = vpop.trf.xlu0
        %v1302 = vsel %vm890, %v1285, 0
        %v1305 = vsel %vm890, %v1261, 0
        %1307 = vmatprep.subr.mxu0 0.0
        %1308 = vmatpush1.xpose.msra.mxu0 %v1305
        %1309 = vmatprep.subr.mxu0 0.0
        %1310 = vmatpush1.xpose.msra.mxu0 0.0
        %1311 = vmatprep.subr.mxu0 0.0
        %1312 = vmatpush1.xpose.msra.mxu0 0.0
        %1313 = vmatprep.subr.mxu0 0.0
        %1314 = vmatpush1.xpose.msra.mxu0 0.0
        %1315 = vmatprep.subr.mxu0 0.0
        %1316 = vmatpush1.xpose.msra.mxu0 0.0
        %1317 = vmatprep.subr.mxu0 0.0
        %1318 = vmatpush1.xpose.msra.mxu0 0.0
        %1319 = vmatprep.subr.mxu0 0.0
        %1320 = vmatpush1.xpose.msra.mxu0 0.0
        %1321 = vmatprep.subr.mxu0 0.0
        %1322 = vmatpush1.xpose.msra.mxu0 0.0
        %1323 = vmatprep.subr.mxu0 0.0
        %1324 = vmatpush1.xpose.msra.mxu0 0.0
        %1325 = vmatprep.subr.mxu0 0.0
        %1326 = vmatpush1.xpose.msra.mxu0 0.0
        %1327 = vmatprep.subr.mxu0 0.0
        %1328 = vmatpush1.xpose.msra.mxu0 0.0
        %1329 = vmatprep.subr.mxu0 0.0
        %1330 = vmatpush1.xpose.msra.mxu0 0.0
        %1331 = vmatprep.subr.mxu0 0.0
        %1332 = vmatpush1.xpose.msra.mxu0 0.0
        %1333 = vmatprep.subr.mxu0 0.0
        %1334 = vmatpush1.xpose.msra.mxu0 0.0
        %1335 = vmatprep.subr.mxu0 0.0
        %1336 = vmatpush1.xpose.msra.mxu0 0.0
        %1337 = vmatprep.subr.mxu0 0.0
        %1338 = vmatpush1.xpose.msra.mxu0 0.0
        %1339 = vmatprep.subr.mxu0 0.0
        %1340 = vmatpush1.xpose.msra.mxu0 0.0
        %1341 = vmatprep.subr.mxu0 0.0
        %1342 = vmatpush1.xpose.msra.mxu0 0.0
        %1343 = vmatprep.subr.mxu0 0.0
        %1344 = vmatpush1.xpose.msra.mxu0 0.0
        %1345 = vmatprep.subr.mxu0 0.0
        %1346 = vmatpush1.xpose.msra.mxu0 0.0
        %1347 = vmatprep.subr.mxu0 0.0
        %1348 = vmatpush1.xpose.msra.mxu0 0.0
        %1349 = vmatprep.subr.mxu0 0.0
        %1350 = vmatpush1.xpose.msra.mxu0 0.0
        %1351 = vmatprep.subr.mxu0 0.0
        %1352 = vmatpush1.xpose.msra.mxu0 0.0
        %1353 = vmatprep.subr.mxu0 0.0
        %1354 = vmatpush1.xpose.msra.mxu0 0.0
        %1355 = vmatprep.subr.mxu0 0.0
        %1356 = vmatpush1.xpose.msra.mxu0 0.0
        %1357 = vmatprep.subr.mxu0 0.0
        %1358 = vmatpush1.xpose.msra.mxu0 0.0
        %1359 = vmatprep.subr.mxu0 0.0
        %1360 = vmatpush1.xpose.msra.mxu0 0.0
        %1361 = vmatprep.subr.mxu0 0.0
        %1362 = vmatpush1.xpose.msra.mxu0 0.0
        %1363 = vmatprep.subr.mxu0 0.0
        %1364 = vmatpush1.xpose.msra.mxu0 0.0
        %1365 = vmatprep.subr.mxu0 0.0
        %1366 = vmatpush1.xpose.msra.mxu0 0.0
        %1367 = vmatprep.subr.mxu0 0.0
        %1368 = vmatpush1.xpose.msra.mxu0 0.0
        %1369 = vmatprep.subr.mxu0 0.0
        %1370 = vmatpush1.xpose.msra.mxu0 0.0
        %1371 = vmatprep.mubr.f32.mxu0 0.0
        %1372 = vmatmul.mubr.f32.gmra.mrb[0].mxu0 %v1302
        %v1373 = vpop.f32.mrb[0].mxu0
        %v1374 = vadd.f32 0.0, %v1373
        %v1375 = vpop.f32.mrb[0].mxu0
        %1376 = vdwg.mxu0
        %1377 = vxpose.xlu0.b32.start [1/16] %v887, 128
        %1378 = vxpose.xlu0.b32.cont [2/16] 0.0, 128
        %1379 = vxpose.xlu0.b32.cont [3/16] 0.0, 128
        %1380 = vxpose.xlu0.b32.cont [4/16] 0.0, 128
        %1381 = vxpose.xlu0.b32.cont [5/16] 0.0, 128
        %1382 = vxpose.xlu0.b32.cont [6/16] 0.0, 128
        %1383 = vxpose.xlu0.b32.cont [7/16] 0.0, 128
        %1384 = vxpose.xlu0.b32.cont [8/16] 0.0, 128
        %1385 = vxpose.xlu0.b32.cont [9/16] 0.0, 128
        %1386 = vxpose.xlu0.b32.cont [10/16] 0.0, 128
        %1387 = vxpose.xlu0.b32.cont [11/16] 0.0, 128
        %1388 = vxpose.xlu0.b32.cont [12/16] 0.0, 128
        %1389 = vxpose.xlu0.b32.cont [13/16] 0.0, 128
        %1390 = vxpose.xlu0.b32.cont [14/16] 0.0, 128
        %1391 = vxpose.xlu0.b32.cont [15/16] 0.0, 128
        %1392 = vxpose.xlu0.b32.end [16/16] 0.0, 128
        %v1393 = vpop.trf.xlu0
        %v1394 = vpop.trf.xlu0
        %v1395 = vpop.trf.xlu0
        %v1396 = vpop.trf.xlu0
        %v1397 = vpop.trf.xlu0
        %v1398 = vpop.trf.xlu0
        %v1399 = vpop.trf.xlu0
        %v1400 = vpop.trf.xlu0
        %v1401 = vpop.trf.xlu0
        %v1402 = vpop.trf.xlu0
        %v1403 = vpop.trf.xlu0
        %v1404 = vpop.trf.xlu0
        %v1405 = vpop.trf.xlu0
        %v1406 = vpop.trf.xlu0
        %v1407 = vpop.trf.xlu0
        %v1408 = vpop.trf.xlu0
        %v1410 = vsel %vm890, %v1393, 0
        %v1413 = vsel %vm890, %v1262, 0
        %1415 = vmatprep.subr.mxu0 0.0
        %1416 = vmatpush1.xpose.msra.mxu0 %v1413
        %1417 = vmatprep.subr.mxu0 0.0
        %1418 = vmatpush1.xpose.msra.mxu0 0.0
        %1419 = vmatprep.subr.mxu0 0.0
        %1420 = vmatpush1.xpose.msra.mxu0 0.0
        %1421 = vmatprep.subr.mxu0 0.0
        %1422 = vmatpush1.xpose.msra.mxu0 0.0
        %1423 = vmatprep.subr.mxu0 0.0
        %1424 = vmatpush1.xpose.msra.mxu0 0.0
        %1425 = vmatprep.subr.mxu0 0.0
        %1426 = vmatpush1.xpose.msra.mxu0 0.0
        %1427 = vmatprep.subr.mxu0 0.0
        %1428 = vmatpush1.xpose.msra.mxu0 0.0
        %1429 = vmatprep.subr.mxu0 0.0
        %1430 = vmatpush1.xpose.msra.mxu0 0.0
        %1431 = vmatprep.subr.mxu0 0.0
        %1432 = vmatpush1.xpose.msra.mxu0 0.0
        %1433 = vmatprep.subr.mxu0 0.0
        %1434 = vmatpush1.xpose.msra.mxu0 0.0
        %1435 = vmatprep.subr.mxu0 0.0
        %1436 = vmatpush1.xpose.msra.mxu0 0.0
        %1437 = vmatprep.subr.mxu0 0.0
        %1438 = vmatpush1.xpose.msra.mxu0 0.0
        %1439 = vmatprep.subr.mxu0 0.0
        %1440 = vmatpush1.xpose.msra.mxu0 0.0
        %1441 = vmatprep.subr.mxu0 0.0
        %1442 = vmatpush1.xpose.msra.mxu0 0.0
        %1443 = vmatprep.subr.mxu0 0.0
        %1444 = vmatpush1.xpose.msra.mxu0 0.0
        %1445 = vmatprep.subr.mxu0 0.0
        %1446 = vmatpush1.xpose.msra.mxu0 0.0
        %1447 = vmatprep.subr.mxu0 0.0
        %1448 = vmatpush1.xpose.msra.mxu0 0.0
        %1449 = vmatprep.subr.mxu0 0.0
        %1450 = vmatpush1.xpose.msra.mxu0 0.0
        %1451 = vmatprep.subr.mxu0 0.0
        %1452 = vmatpush1.xpose.msra.mxu0 0.0
        %1453 = vmatprep.subr.mxu0 0.0
        %1454 = vmatpush1.xpose.msra.mxu0 0.0
        %1455 = vmatprep.subr.mxu0 0.0
        %1456 = vmatpush1.xpose.msra.mxu0 0.0
        %1457 = vmatprep.subr.mxu0 0.0
        %1458 = vmatpush1.xpose.msra.mxu0 0.0
        %1459 = vmatprep.subr.mxu0 0.0
        %1460 = vmatpush1.xpose.msra.mxu0 0.0
        %1461 = vmatprep.subr.mxu0 0.0
        %1462 = vmatpush1.xpose.msra.mxu0 0.0
        %1463 = vmatprep.subr.mxu0 0.0
        %1464 = vmatpush1.xpose.msra.mxu0 0.0
        %1465 = vmatprep.subr.mxu0 0.0
        %1466 = vmatpush1.xpose.msra.mxu0 0.0
        %1467 = vmatprep.subr.mxu0 0.0
        %1468 = vmatpush1.xpose.msra.mxu0 0.0
        %1469 = vmatprep.subr.mxu0 0.0
        %1470 = vmatpush1.xpose.msra.mxu0 0.0
        %1471 = vmatprep.subr.mxu0 0.0
        %1472 = vmatpush1.xpose.msra.mxu0 0.0
        %1473 = vmatprep.subr.mxu0 0.0
        %1474 = vmatpush1.xpose.msra.mxu0 0.0
        %1475 = vmatprep.subr.mxu0 0.0
        %1476 = vmatpush1.xpose.msra.mxu0 0.0
        %1477 = vmatprep.subr.mxu0 0.0
        %1478 = vmatpush1.xpose.msra.mxu0 0.0
        %1479 = vmatprep.mubr.f32.mxu0 0.0
        %1480 = vmatmul.mubr.f32.gmra.mrb[0].mxu0 %v1410
        %v1481 = vpop.f32.mrb[0].mxu0
        %v1482 = vadd.f32 0.0, %v1481
        %v1483 = vpop.f32.mrb[0].mxu0
        %1484 = vdwg.mxu0
        %1485 = vxpose.xlu0.b32.start [1/16] %v888, 128
        %1486 = vxpose.xlu0.b32.cont [2/16] 0.0, 128
        %1487 = vxpose.xlu0.b32.cont [3/16] 0.0, 128
        %1488 = vxpose.xlu0.b32.cont [4/16] 0.0, 128
        %1489 = vxpose.xlu0.b32.cont [5/16] 0.0, 128
        %1490 = vxpose.xlu0.b32.cont [6/16] 0.0, 128
        %1491 = vxpose.xlu0.b32.cont [7/16] 0.0, 128
        %1492 = vxpose.xlu0.b32.cont [8/16] 0.0, 128
        %1493 = vxpose.xlu0.b32.cont [9/16] 0.0, 128
        %1494 = vxpose.xlu0.b32.cont [10/16] 0.0, 128
        %1495 = vxpose.xlu0.b32.cont [11/16] 0.0, 128
        %1496 = vxpose.xlu0.b32.cont [12/16] 0.0, 128
        %1497 = vxpose.xlu0.b32.cont [13/16] 0.0, 128
        %1498 = vxpose.xlu0.b32.cont [14/16] 0.0, 128
        %1499 = vxpose.xlu0.b32.cont [15/16] 0.0, 128
        %1500 = vxpose.xlu0.b32.end [16/16] 0.0, 128
        %v1501 = vpop.trf.xlu0
        %v1502 = vpop.trf.xlu0
        %v1503 = vpop.trf.xlu0
        %v1504 = vpop.trf.xlu0
        %v1505 = vpop.trf.xlu0
        %v1506 = vpop.trf.xlu0
        %v1507 = vpop.trf.xlu0
        %v1508 = vpop.trf.xlu0
        %v1509 = vpop.trf.xlu0
        %v1510 = vpop.trf.xlu0
        %v1511 = vpop.trf.xlu0
        %v1512 = vpop.trf.xlu0
        %v1513 = vpop.trf.xlu0
        %v1514 = vpop.trf.xlu0
        %v1515 = vpop.trf.xlu0
        %v1516 = vpop.trf.xlu0
        %v1518 = vsel %vm890, %v1501, 0
        %v1521 = vsel %vm890, %v1263, 0
        %1523 = vmatprep.subr.mxu0 0.0
        %1524 = vmatpush1.xpose.msra.mxu0 %v1521
        %1525 = vmatprep.subr.mxu0 0.0
        %1526 = vmatpush1.xpose.msra.mxu0 0.0
        %1527 = vmatprep.subr.mxu0 0.0
        %1528 = vmatpush1.xpose.msra.mxu0 0.0
        %1529 = vmatprep.subr.mxu0 0.0
        %1530 = vmatpush1.xpose.msra.mxu0 0.0
        %1531 = vmatprep.subr.mxu0 0.0
        %1532 = vmatpush1.xpose.msra.mxu0 0.0
        %1533 = vmatprep.subr.mxu0 0.0
        %1534 = vmatpush1.xpose.msra.mxu0 0.0
        %1535 = vmatprep.subr.mxu0 0.0
        %1536 = vmatpush1.xpose.msra.mxu0 0.0
        %1537 = vmatprep.subr.mxu0 0.0
        %1538 = vmatpush1.xpose.msra.mxu0 0.0
        %1539 = vmatprep.subr.mxu0 0.0
        %1540 = vmatpush1.xpose.msra.mxu0 0.0
        %1541 = vmatprep.subr.mxu0 0.0
        %1542 = vmatpush1.xpose.msra.mxu0 0.0
        %1543 = vmatprep.subr.mxu0 0.0
        %1544 = vmatpush1.xpose.msra.mxu0 0.0
        %1545 = vmatprep.subr.mxu0 0.0
        %1546 = vmatpush1.xpose.msra.mxu0 0.0
        %1547 = vmatprep.subr.mxu0 0.0
        %1548 = vmatpush1.xpose.msra.mxu0 0.0
        %1549 = vmatprep.subr.mxu0 0.0
        %1550 = vmatpush1.xpose.msra.mxu0 0.0
        %1551 = vmatprep.subr.mxu0 0.0
        %1552 = vmatpush1.xpose.msra.mxu0 0.0
        %1553 = vmatprep.subr.mxu0 0.0
        %1554 = vmatpush1.xpose.msra.mxu0 0.0
        %1555 = vmatprep.subr.mxu0 0.0
        %1556 = vmatpush1.xpose.msra.mxu0 0.0
        %1557 = vmatprep.subr.mxu0 0.0
        %1558 = vmatpush1.xpose.msra.mxu0 0.0
        %1559 = vmatprep.subr.mxu0 0.0
        %1560 = vmatpush1.xpose.msra.mxu0 0.0
        %1561 = vmatprep.subr.mxu0 0.0
        %1562 = vmatpush1.xpose.msra.mxu0 0.0
        %1563 = vmatprep.subr.mxu0 0.0
        %1564 = vmatpush1.xpose.msra.mxu0 0.0
        %1565 = vmatprep.subr.mxu0 0.0
        %1566 = vmatpush1.xpose.msra.mxu0 0.0
        %1567 = vmatprep.subr.mxu0 0.0
        %1568 = vmatpush1.xpose.msra.mxu0 0.0
        %1569 = vmatprep.subr.mxu0 0.0
        %1570 = vmatpush1.xpose.msra.mxu0 0.0
        %1571 = vmatprep.subr.mxu0 0.0
        %1572 = vmatpush1.xpose.msra.mxu0 0.0
        %1573 = vmatprep.subr.mxu0 0.0
        %1574 = vmatpush1.xpose.msra.mxu0 0.0
        %1575 = vmatprep.subr.mxu0 0.0
        %1576 = vmatpush1.xpose.msra.mxu0 0.0
        %1577 = vmatprep.subr.mxu0 0.0
        %1578 = vmatpush1.xpose.msra.mxu0 0.0
        %1579 = vmatprep.subr.mxu0 0.0
        %1580 = vmatpush1.xpose.msra.mxu0 0.0
        %1581 = vmatprep.subr.mxu0 0.0
        %1582 = vmatpush1.xpose.msra.mxu0 0.0
        %1583 = vmatprep.subr.mxu0 0.0
        %1584 = vmatpush1.xpose.msra.mxu0 0.0
        %1585 = vmatprep.subr.mxu0 0.0
        %1586 = vmatpush1.xpose.msra.mxu0 0.0
        %1587 = vmatprep.mubr.f32.mxu0 0.0
        %1588 = vmatmul.mubr.f32.gmra.mrb[0].mxu0 %v1518
        %v1589 = vpop.f32.mrb[0].mxu0
        %v1590 = vadd.f32 0.0, %v1589
        %v1591 = vpop.f32.mrb[0].mxu0
        %1592 = vdwg.mxu0
        %1593 = vxpose.xlu0.b32.start [1/16] %v889, 128
        %1594 = vxpose.xlu0.b32.cont [2/16] 0.0, 128
        %1595 = vxpose.xlu0.b32.cont [3/16] 0.0, 128
        %1596 = vxpose.xlu0.b32.cont [4/16] 0.0, 128
        %1597 = vxpose.xlu0.b32.cont [5/16] 0.0, 128
        %1598 = vxpose.xlu0.b32.cont [6/16] 0.0, 128
        %1599 = vxpose.xlu0.b32.cont [7/16] 0.0, 128
        %1600 = vxpose.xlu0.b32.cont [8/16] 0.0, 128
        %1601 = vxpose.xlu0.b32.cont [9/16] 0.0, 128
        %1602 = vxpose.xlu0.b32.cont [10/16] 0.0, 128
        %1603 = vxpose.xlu0.b32.cont [11/16] 0.0, 128
        %1604 = vxpose.xlu0.b32.cont [12/16] 0.0, 128
        %1605 = vxpose.xlu0.b32.cont [13/16] 0.0, 128
        %1606 = vxpose.xlu0.b32.cont [14/16] 0.0, 128
        %1607 = vxpose.xlu0.b32.cont [15/16] 0.0, 128
        %1608 = vxpose.xlu0.b32.end [16/16] 0.0, 128
        %v1609 = vpop.trf.xlu0
        %v1610 = vpop.trf.xlu0
        %v1611 = vpop.trf.xlu0
        %v1612 = vpop.trf.xlu0
        %v1613 = vpop.trf.xlu0
        %v1614 = vpop.trf.xlu0
        %v1615 = vpop.trf.xlu0
        %v1616 = vpop.trf.xlu0
        %v1617 = vpop.trf.xlu0
        %v1618 = vpop.trf.xlu0
        %v1619 = vpop.trf.xlu0
        %v1620 = vpop.trf.xlu0
        %v1621 = vpop.trf.xlu0
        %v1622 = vpop.trf.xlu0
        %v1623 = vpop.trf.xlu0
        %v1624 = vpop.trf.xlu0
        %v1626 = vsel %vm890, %v1609, 0
        %v1629 = vsel %vm890, %v1264, 0
        %1631 = vmatprep.subr.mxu0 0.0
        %1632 = vmatpush1.xpose.msra.mxu0 %v1629
        %1633 = vmatprep.subr.mxu0 0.0
        %1634 = vmatpush1.xpose.msra.mxu0 0.0
        %1635 = vmatprep.subr.mxu0 0.0
        %1636 = vmatpush1.xpose.msra.mxu0 0.0
        %1637 = vmatprep.subr.mxu0 0.0
        %1638 = vmatpush1.xpose.msra.mxu0 0.0
        %1639 = vmatprep.subr.mxu0 0.0
        %1640 = vmatpush1.xpose.msra.mxu0 0.0
        %1641 = vmatprep.subr.mxu0 0.0
        %1642 = vmatpush1.xpose.msra.mxu0 0.0
        %1643 = vmatprep.subr.mxu0 0.0
        %1644 = vmatpush1.xpose.msra.mxu0 0.0
        %1645 = vmatprep.subr.mxu0 0.0
        %1646 = vmatpush1.xpose.msra.mxu0 0.0
        %1647 = vmatprep.subr.mxu0 0.0
        %1648 = vmatpush1.xpose.msra.mxu0 0.0
        %1649 = vmatprep.subr.mxu0 0.0
        %1650 = vmatpush1.xpose.msra.mxu0 0.0
        %1651 = vmatprep.subr.mxu0 0.0
        %1652 = vmatpush1.xpose.msra.mxu0 0.0
        %1653 = vmatprep.subr.mxu0 0.0
        %1654 = vmatpush1.xpose.msra.mxu0 0.0
        %1655 = vmatprep.subr.mxu0 0.0
        %1656 = vmatpush1.xpose.msra.mxu0 0.0
        %1657 = vmatprep.subr.mxu0 0.0
        %1658 = vmatpush1.xpose.msra.mxu0 0.0
        %1659 = vmatprep.subr.mxu0 0.0
        %1660 = vmatpush1.xpose.msra.mxu0 0.0
        %1661 = vmatprep.subr.mxu0 0.0
        %1662 = vmatpush1.xpose.msra.mxu0 0.0
        %1663 = vmatprep.subr.mxu0 0.0
        %1664 = vmatpush1.xpose.msra.mxu0 0.0
        %1665 = vmatprep.subr.mxu0 0.0
        %1666 = vmatpush1.xpose.msra.mxu0 0.0
        %1667 = vmatprep.subr.mxu0 0.0
        %1668 = vmatpush1.xpose.msra.mxu0 0.0
        %1669 = vmatprep.subr.mxu0 0.0
        %1670 = vmatpush1.xpose.msra.mxu0 0.0
        %1671 = vmatprep.subr.mxu0 0.0
        %1672 = vmatpush1.xpose.msra.mxu0 0.0
        %1673 = vmatprep.subr.mxu0 0.0
        %1674 = vmatpush1.xpose.msra.mxu0 0.0
        %1675 = vmatprep.subr.mxu0 0.0
        %1676 = vmatpush1.xpose.msra.mxu0 0.0
        %1677 = vmatprep.subr.mxu0 0.0
        %1678 = vmatpush1.xpose.msra.mxu0 0.0
        %1679 = vmatprep.subr.mxu0 0.0
        %1680 = vmatpush1.xpose.msra.mxu0 0.0
        %1681 = vmatprep.subr.mxu0 0.0
        %1682 = vmatpush1.xpose.msra.mxu0 0.0
        %1683 = vmatprep.subr.mxu0 0.0
        %1684 = vmatpush1.xpose.msra.mxu0 0.0
        %1685 = vmatprep.subr.mxu0 0.0
        %1686 = vmatpush1.xpose.msra.mxu0 0.0
        %1687 = vmatprep.subr.mxu0 0.0
        %1688 = vmatpush1.xpose.msra.mxu0 0.0
        %1689 = vmatprep.subr.mxu0 0.0
        %1690 = vmatpush1.xpose.msra.mxu0 0.0
        %1691 = vmatprep.subr.mxu0 0.0
        %1692 = vmatpush1.xpose.msra.mxu0 0.0
        %1693 = vmatprep.subr.mxu0 0.0
        %1694 = vmatpush1.xpose.msra.mxu0 0.0
        %1695 = vmatprep.mubr.f32.mxu0 0.0
        %1696 = vmatmul.mubr.f32.gmra.mrb[0].mxu0 %v1626
        %v1697 = vpop.f32.mrb[0].mxu0
        %v1698 = vadd.f32 0.0, %v1697
        %v1699 = vpop.f32.mrb[0].mxu0
        %1700 = vdwg.mxu0
        %1701 = vxpose.xlu0.b32.start [1/16] %v1374, 128
        %1702 = vxpose.xlu0.b32.cont [2/16] 0.0, 128
        %1703 = vxpose.xlu0.b32.cont [3/16] 0.0, 128
        %1704 = vxpose.xlu0.b32.cont [4/16] 0.0, 128
        %1705 = vxpose.xlu0.b32.cont [5/16] 0.0, 128
        %1706 = vxpose.xlu0.b32.cont [6/16] 0.0, 128
        %1707 = vxpose.xlu0.b32.cont [7/16] 0.0, 128
        %1708 = vxpose.xlu0.b32.cont [8/16] 0.0, 128
        %1709 = vxpose.xlu0.b32.cont [9/16] 0.0, 128
        %1710 = vxpose.xlu0.b32.cont [10/16] 0.0, 128
        %1711 = vxpose.xlu0.b32.cont [11/16] 0.0, 128
        %1712 = vxpose.xlu0.b32.cont [12/16] 0.0, 128
        %1713 = vxpose.xlu0.b32.cont [13/16] 0.0, 128
        %1714 = vxpose.xlu0.b32.cont [14/16] 0.0, 128
        %1715 = vxpose.xlu0.b32.cont [15/16] 0.0, 128
        %1716 = vxpose.xlu0.b32.end [16/16] 0.0, 128
        %v1717 = vpop.trf.xlu0
        %v1718 = vpop.trf.xlu0
        %v1719 = vpop.trf.xlu0
        %v1720 = vpop.trf.xlu0
        %v1721 = vpop.trf.xlu0
        %v1722 = vpop.trf.xlu0
        %v1723 = vpop.trf.xlu0
        %v1724 = vpop.trf.xlu0
        %v1725 = vpop.trf.xlu0
        %v1726 = vpop.trf.xlu0
        %v1727 = vpop.trf.xlu0
        %v1728 = vpop.trf.xlu0
        %v1729 = vpop.trf.xlu0
        %v1730 = vpop.trf.xlu0
        %v1731 = vpop.trf.xlu0
        %v1732 = vpop.trf.xlu0
        %1733 = vxpose.xlu0.b32.start [1/16] %v1482, 128
        %1734 = vxpose.xlu0.b32.cont [2/16] 0.0, 128
        %1735 = vxpose.xlu0.b32.cont [3/16] 0.0, 128
        %1736 = vxpose.xlu0.b32.cont [4/16] 0.0, 128
        %1737 = vxpose.xlu0.b32.cont [5/16] 0.0, 128
        %1738 = vxpose.xlu0.b32.cont [6/16] 0.0, 128
        %1739 = vxpose.xlu0.b32.cont [7/16] 0.0, 128
        %1740 = vxpose.xlu0.b32.cont [8/16] 0.0, 128
        %1741 = vxpose.xlu0.b32.cont [9/16] 0.0, 128
        %1742 = vxpose.xlu0.b32.cont [10/16] 0.0, 128
        %1743 = vxpose.xlu0.b32.cont [11/16] 0.0, 128
        %1744 = vxpose.xlu0.b32.cont [12/16] 0.0, 128
        %1745 = vxpose.xlu0.b32.cont [13/16] 0.0, 128
        %1746 = vxpose.xlu0.b32.cont [14/16] 0.0, 128
        %1747 = vxpose.xlu0.b32.cont [15/16] 0.0, 128
        %1748 = vxpose.xlu0.b32.end [16/16] 0.0, 128
        %v1749 = vpop.trf.xlu0
        %v1750 = vpop.trf.xlu0
        %v1751 = vpop.trf.xlu0
        %v1752 = vpop.trf.xlu0
        %v1753 = vpop.trf.xlu0
        %v1754 = vpop.trf.xlu0
        %v1755 = vpop.trf.xlu0
        %v1756 = vpop.trf.xlu0
        %v1757 = vpop.trf.xlu0
        %v1758 = vpop.trf.xlu0
        %v1759 = vpop.trf.xlu0
        %v1760 = vpop.trf.xlu0
        %v1761 = vpop.trf.xlu0
        %v1762 = vpop.trf.xlu0
        %v1763 = vpop.trf.xlu0
        %v1764 = vpop.trf.xlu0
        %1765 = vxpose.xlu0.b32.start [1/16] %v1590, 128
        %1766 = vxpose.xlu0.b32.cont [2/16] 0.0, 128
        %1767 = vxpose.xlu0.b32.cont [3/16] 0.0, 128
        %1768 = vxpose.xlu0.b32.cont [4/16] 0.0, 128
        %1769 = vxpose.xlu0.b32.cont [5/16] 0.0, 128
        %1770 = vxpose.xlu0.b32.cont [6/16] 0.0, 128
        %1771 = vxpose.xlu0.b32.cont [7/16] 0.0, 128
        %1772 = vxpose.xlu0.b32.cont [8/16] 0.0, 128
        %1773 = vxpose.xlu0.b32.cont [9/16] 0.0, 128
        %1774 = vxpose.xlu0.b32.cont [10/16] 0.0, 128
        %1775 = vxpose.xlu0.b32.cont [11/16] 0.0, 128
        %1776 = vxpose.xlu0.b32.cont [12/16] 0.0, 128
        %1777 = vxpose.xlu0.b32.cont [13/16] 0.0, 128
        %1778 = vxpose.xlu0.b32.cont [14/16] 0.0, 128
        %1779 = vxpose.xlu0.b32.cont [15/16] 0.0, 128
        %1780 = vxpose.xlu0.b32.end [16/16] 0.0, 128
        %v1781 = vpop.trf.xlu0
        %v1782 = vpop.trf.xlu0
        %v1783 = vpop.trf.xlu0
        %v1784 = vpop.trf.xlu0
        %v1785 = vpop.trf.xlu0
        %v1786 = vpop.trf.xlu0
        %v1787 = vpop.trf.xlu0
        %v1788 = vpop.trf.xlu0
        %v1789 = vpop.trf.xlu0
        %v1790 = vpop.trf.xlu0
        %v1791 = vpop.trf.xlu0
        %v1792 = vpop.trf.xlu0
        %v1793 = vpop.trf.xlu0
        %v1794 = vpop.trf.xlu0
        %v1795 = vpop.trf.xlu0
        %v1796 = vpop.trf.xlu0
        %1797 = vxpose.xlu0.b32.start [1/16] %v1698, 128
        %1798 = vxpose.xlu0.b32.cont [2/16] 0.0, 128
        %1799 = vxpose.xlu0.b32.cont [3/16] 0.0, 128
        %1800 = vxpose.xlu0.b32.cont [4/16] 0.0, 128
        %1801 = vxpose.xlu0.b32.cont [5/16] 0.0, 128
        %1802 = vxpose.xlu0.b32.cont [6/16] 0.0, 128
        %1803 = vxpose.xlu0.b32.cont [7/16] 0.0, 128
        %1804 = vxpose.xlu0.b32.cont [8/16] 0.0, 128
        %1805 = vxpose.xlu0.b32.cont [9/16] 0.0, 128
        %1806 = vxpose.xlu0.b32.cont [10/16] 0.0, 128
        %1807 = vxpose.xlu0.b32.cont [11/16] 0.0, 128
        %1808 = vxpose.xlu0.b32.cont [12/16] 0.0, 128
        %1809 = vxpose.xlu0.b32.cont [13/16] 0.0, 128
        %1810 = vxpose.xlu0.b32.cont [14/16] 0.0, 128
        %1811 = vxpose.xlu0.b32.cont [15/16] 0.0, 128
        %1812 = vxpose.xlu0.b32.end [16/16] 0.0, 128
        %v1813 = vpop.trf.xlu0
        %v1814 = vpop.trf.xlu0
        %v1815 = vpop.trf.xlu0
        %v1816 = vpop.trf.xlu0
        %v1817 = vpop.trf.xlu0
        %v1818 = vpop.trf.xlu0
        %v1819 = vpop.trf.xlu0
        %v1820 = vpop.trf.xlu0
        %v1821 = vpop.trf.xlu0
        %v1822 = vpop.trf.xlu0
        %v1823 = vpop.trf.xlu0
        %v1824 = vpop.trf.xlu0
        %v1825 = vpop.trf.xlu0
        %v1826 = vpop.trf.xlu0
        %v1827 = vpop.trf.xlu0
        %v1828 = vpop.trf.xlu0
        %v1829 = vcombine.low %v1717, %v1781
        %v1830 = vcombine.high %v1717, %v1781
        %v1832 = vunpack.c.l.s4 1983009808
        %v1833 = vunpack.c.0.s8 %v1832
        %v1834 = vlaneseq
        %v1835 = vshrl.u32 %v1834, 7
        %v1836 = vsub.s32 %v1833, %v1835
        %v1837 = vrot.slane %v1829, %v1836
        %v1839 = vunpack.c.l.s4 1983009808
        %v1840 = vunpack.c.0.s8 %v1839
        %v1841 = vlaneseq
        %v1842 = vshrl.u32 %v1841, 7
        %v1843 = vsub.s32 %v1840, %v1842
        %v1844 = vrot.slane %v1830, %v1843
        %v1845 = vcombine.low %v1749, %v1813
        %v1846 = vcombine.high %v1749, %v1813
        %v1848 = vunpack.c.l.s4 1983009808
        %v1849 = vunpack.c.0.s8 %v1848
        %v1850 = vlaneseq
        %v1851 = vshrl.u32 %v1850, 7
        %v1852 = vsub.s32 %v1849, %v1851
        %v1853 = vrot.slane %v1845, %v1852
        %v1855 = vunpack.c.l.s4 1983009808
        %v1856 = vunpack.c.0.s8 %v1855
        %v1857 = vlaneseq
        %v1858 = vshrl.u32 %v1857, 7
        %v1859 = vsub.s32 %v1856, %v1858
        %v1860 = vrot.slane %v1846, %v1859
        %v1861 = vcombine.low %v1837, %v1853
        %v1862 = vcombine.high %v1837, %v1853
        %v1864 = vunpack.c.l.s4 1934713408
        %v1865 = vunpack.c.0.s8 %v1864
        %v1866 = vlaneseq
        %v1867 = vshrl.u32 %v1866, 7
        %v1868 = vsub.s32 %v1865, %v1867
        %v1869 = vrot.slane %v1861, %v1868
        %v1871 = vunpack.c.l.s4 1934713408
        %v1872 = vunpack.c.0.s8 %v1871
        %v1873 = vlaneseq
        %v1874 = vshrl.u32 %v1873, 7
        %v1875 = vsub.s32 %v1872, %v1874
        %v1876 = vrot.slane %v1862, %v1875
        %v1877 = vcombine.low %v1844, %v1860
        %v1878 = vcombine.high %v1844, %v1860
        %v1880 = vunpack.c.l.s4 1934713408
        %v1881 = vunpack.c.0.s8 %v1880
        %v1882 = vlaneseq
        %v1883 = vshrl.u32 %v1882, 7
        %v1884 = vsub.s32 %v1881, %v1883
        %v1885 = vrot.slane %v1877, %v1884
        %v1887 = vunpack.c.l.s4 1934713408
        %v1888 = vunpack.c.0.s8 %v1887
        %v1889 = vlaneseq
        %v1890 = vshrl.u32 %v1889, 7
        %v1891 = vsub.s32 %v1888, %v1890
        %v1892 = vrot.slane %v1878, %v1891
        %v1893 = vcombine.high %v1869, 0.0
        %v1894 = vcombine.high %v1876, 0.0
        %v1895 = vcombine.high %v1885, 0.0
        %v1896 = vcombine.high %v1892, 0.0
        %v1897 = vcombine.low %v1869, %v1876
        %v1899 = vunpack.c.l.s4 1983009808
        %v1900 = vunpack.c.0.s8 %v1899
        %v1901 = vlaneseq
        %v1902 = vshrl.u32 %v1901, 7
        %v1903 = vsub.s32 %v1900, %v1902
        %v1904 = vrot.slane %v1897, %v1903
        %v1905 = vcombine.low %v1893, %v1894
        %v1907 = vunpack.c.l.s4 1983009808
        %v1908 = vunpack.c.0.s8 %v1907
        %v1909 = vlaneseq
        %v1910 = vshrl.u32 %v1909, 7
        %v1911 = vsub.s32 %v1908, %v1910
        %v1912 = vrot.slane %v1905, %v1911
        %v1913 = vcombine.low %v1885, %v1892
        %v1915 = vunpack.c.l.s4 1983009808
        %v1916 = vunpack.c.0.s8 %v1915
        %v1917 = vlaneseq
        %v1918 = vshrl.u32 %v1917, 7
        %v1919 = vsub.s32 %v1916, %v1918
        %v1920 = vrot.slane %v1913, %v1919
        %v1921 = vcombine.low %v1895, %v1896
        %v1923 = vunpack.c.l.s4 1983009808
        %v1924 = vunpack.c.0.s8 %v1923
        %v1925 = vlaneseq
        %v1926 = vshrl.u32 %v1925, 7
        %v1927 = vsub.s32 %v1924, %v1926
        %v1928 = vrot.slane %v1921, %v1927
        %v1929 = vcombine.low %v1904, %v1912
        %v1930 = vcombine.high %v1904, %v1912
        %v1932 = vunpack.c.l.s4 1934713408
        %v1933 = vunpack.c.0.s8 %v1932
        %v1934 = vlaneseq
        %v1935 = vshrl.u32 %v1934, 7
        %v1936 = vsub.s32 %v1933, %v1935
        %v1937 = vrot.slane %v1929, %v1936
        %v1939 = vunpack.c.l.s4 1934713408
        %v1940 = vunpack.c.0.s8 %v1939
        %v1941 = vlaneseq
        %v1942 = vshrl.u32 %v1941, 7
        %v1943 = vsub.s32 %v1940, %v1942
        %v1944 = vrot.slane %v1930, %v1943
        %v1945 = vcombine.low %v1920, %v1928
        %v1946 = vcombine.high %v1920, %v1928
        %v1948 = vunpack.c.l.s4 1934713408
        %v1949 = vunpack.c.0.s8 %v1948
        %v1950 = vlaneseq
        %v1951 = vshrl.u32 %v1950, 7
        %v1952 = vsub.s32 %v1949, %v1951
        %v1953 = vrot.slane %v1945, %v1952
        %v1955 = vunpack.c.l.s4 1934713408
        %v1956 = vunpack.c.0.s8 %v1955
        %v1957 = vlaneseq
        %v1958 = vshrl.u32 %v1957, 7
        %v1959 = vsub.s32 %v1956, %v1958
        %v1960 = vrot.slane %v1946, %v1959
        %v1961 = vcombine.low %v1937, %v1953
        %v1962 = vcombine.high %v1937, %v1953
        %v1963 = vcombine.low %v1944, %v1960
        %v1964 = vcombine.high %v1944, %v1960
        %1966 = vrot.lane.b32.xlu0 %v1962, 8
        %v1967 = vpop.permute.xlu0 %1966
        %1970 = vrot.lane.b32.xlu0 %v1963, 16
        %v1971 = vpop.permute.xlu0 %1970
        %1974 = vrot.lane.b32.xlu0 %v1964, 24
        %v1975 = vpop.permute.xlu0 %1974
        %v1977 = vsel %vm890, %v1961, %v1967
        %vm1978 = vcmask 130048
        %v1979 = vsel %vm1978, %v1977, %v1971
        %vm1980 = vcmask 195584
        %v1981 = vsel %vm1980, %v1979, %v1975
        %vm1982 = vcmask 261120
        %1983 = vst.msk [vmem:[%s315] sm:$0xff] %vm1982, %v1981
        %s1984 = sand.u32 %s162, 1
        %s1985 = scalar_lea.sflag [#allocation7], %s1984
        %s1986 = sand.u32 %s162, 1
        %s1987 = smul.addr %s1986, 8
        %s1988 = scalar_lea.vmem [#allocation10], %s1987
        %s1989 = sand.u32 %s192, 1
        %s1990 = scalar_lea.sflag [#allocation12], %s1989
        %s1991 = sand.u32 %s192, 1
        %s1992 = smul.addr %s1991, 32
        %s1993 = scalar_lea.vmem [#allocation11], %s1992
        // Predicated region
        $region49: #{tpu_custom_call.1} parent=35 // pred_check
          %p1994 = pneg %p172
        $region50: #{tpu_custom_call.1} parent=35 // pred_check_branch
          %1996 = sbr.rel (%p1994) target = $region52
        $region51: #{tpu_custom_call.1} parent=35 // pred_region
          %s1998 = ssub.s32 128, 128
          %1999 = vsyncadd %s1985, %s1998
          %s2000 = sadd.s32 %s33, %s34
          %s2001 = sadd.s32 %s2000, %s32
          %s2002 = smul.addr %s2001, 128
          %s2003 = scalar_lea.hbm %s4, %s2002
          %s2005 = sshll.u32 %s1988, 4
          %s2006 = int_to_ptr.vmem [resolvable:$true] %s2005
          %2008 = dma.vmem_to_hbm [thread:$0]  %s2006, 128, %s2003, %s1985
        $region52: #{tpu_custom_call.1} parent=35 // pred_fallthru
          _
        // Predicated region
        $region53: #{tpu_custom_call.1} parent=35 // pred_check
          %p2009 = pneg %p202
        $region54: #{tpu_custom_call.1} parent=35 // pred_check_branch
          %2011 = sbr.rel (%p2009) target = $region56
        $region55: #{tpu_custom_call.1} parent=35 // pred_region
          %s2012 = smul.u32 4, %s33
          %s2014 = ssub.s32 512, 512
          %2015 = vsyncadd %s1990, %s2014
          %s2016 = sadd.s32 %s34, %s2012
          %s2017 = smul.addr %s32, 4
          %s2018 = sadd.s32 %s2016, %s2017
          %s2019 = smul.addr %s2018, 128
          %s2020 = scalar_lea.hbm %s5, %s2019
          %s2021 = sshll.u32 %s1993, 4
          %s2022 = int_to_ptr.vmem [resolvable:$true] %s2021
          %2027 = dma.vmem_to_hbm [thread:$0]  %s2022, 512, %s2020, %s1990, 128, 128, 8
        $region56: #{tpu_custom_call.1} parent=35 // pred_fallthru
          _
      $region36: #{tpu_custom_call.1} parent=5 // pred_fallthru
        _
      %p2028 = scmp.le.s32.totalorder 2, %s22
      // Predicated region
      $region57: #{tpu_custom_call.1} parent=5 // pred_check
        %p2029 = pneg %p2028
      $region58: #{tpu_custom_call.1} parent=5 // pred_check_branch
        %2031 = sbr.rel (%p2029) target = $region60
      $region59: #{tpu_custom_call.1} parent=5 // pred_region
        %s2032 = ssub.s32 %s22, 2
        // Predicated region
        $region61: #{tpu_custom_call.1} parent=59 // pred_check
          %p2033 = pneg %p178
        $region62: #{tpu_custom_call.1} parent=59 // pred_check_branch
          %2035 = sbr.rel (%p2033) target = $region64
        $region63: #{tpu_custom_call.1} parent=59 // pred_region
          %s2036 = sand.u32 %s163, 1
          %s2037 = scalar_lea.sflag [#allocation7], %s2036
          %s2038 = sand.u32 %s163, 1
          %s2039 = smul.addr %s2038, 8
          %s2040 = scalar_lea.vmem [#allocation10], %s2039
          %2041 = dma.done %s2037, 128
        $region64: #{tpu_custom_call.1} parent=59 // pred_fallthru
          _
        // Predicated region
        $region65: #{tpu_custom_call.1} parent=59 // pred_check
          %p2042 = pneg %p208
        $region66: #{tpu_custom_call.1} parent=59 // pred_check_branch
          %2044 = sbr.rel (%p2042) target = $region68
        $region67: #{tpu_custom_call.1} parent=59 // pred_region
          %s2045 = sand.u32 %s193, 1
          %s2046 = scalar_lea.sflag [#allocation12], %s2045
          %s2047 = sand.u32 %s193, 1
          %s2048 = smul.addr %s2047, 32
          %s2049 = scalar_lea.vmem [#allocation11], %s2048
          %2050 = dma.done %s2046, 512
        $region68: #{tpu_custom_call.1} parent=59 // pred_fallthru
          _
      $region60: #{tpu_custom_call.1} parent=5 // pred_fallthru
        _
    $region6: #{tpu_custom_call.1} parent=1 // loop_footer
      %s26 = sadd.s32 1, %s22
    $region7: #{tpu_custom_call.1} parent=1 // loop_footer_branch
      %21 = sbr.rel target = $region3
    $region8: #{tpu_custom_call.1} parent=1 // loop_exit
      _
    %2051 = vsyncpa [#allocation6], 1
    %s2052 = scalar_lea.sflag [#allocation6], 1
    %2053 = vsyncpa %s2052, 1
    %2054 = vsyncpa [#allocation9], 1
    %2055 = vsyncpa [#allocation7], 1
    %s2056 = scalar_lea.sflag [#allocation7], 1
    %2057 = vsyncpa %s2056, 1
    %2058 = vsyncpa [#allocation12], 1
    %s2059 = scalar_lea.sflag [#allocation12], 1
    %2060 = vsyncpa %s2059, 1

</llo_original>
